<compile_context>
chip_gen: v7x
topology: tpu7x:2x2x1
jax: 0.10.0
libtpu: 0.0.40
codegen_flags: <defaults>
</compile_context>

<pallas_src>
import math

import jax
import jax.numpy as jnp
from jax.experimental import pallas as pl
from jax.experimental.pallas import tpu as pltpu


def _round_up(x, m):
    return ((x + m - 1) // m) * m


# ----------------------------- Pallas kernel ---------------------------------

def make_final_mlp_kernel(n_rest, n_inputs, n_fields, b_out, mxu_dtype):
    """idx -> multi-hot @ Tall (folded embedding+layer0) -> block-diagonal hidden layers
    -> fused InteractionAggregation epilogue."""

    def kernel(*refs):
        idx_ref, tall_ref, b0_ref = refs[0], refs[1], refs[2]
        pos = 3
        bt = idx_ref.shape[0]

        # --- folded embedding + fused first layer of both branches ----------------
        # z0[b] = sum_f Tall[idx[b, f]]  ==  feat[b] @ [W1_0 | W2_0]   (exact fold)
        idx = idx_ref[...]                                              # (bt, F) int32
        iota = jax.lax.broadcasted_iota(jnp.int32, (bt, n_inputs), 1)
        mh = jnp.zeros((bt, n_inputs), jnp.float32)
        for f in range(n_fields):                                       # F is tiny & static
            mh = mh + jnp.where(iota == idx[:, f:f + 1], 1.0, 0.0)
        z = jnp.dot(mh.astype(mxu_dtype), tall_ref[...],
                    preferred_element_type=jnp.float32)
        z = jnp.maximum(z + b0_ref[...], 0.0)                           # bias+BN folded, ReLU

        # --- remaining layers: both branches in ONE block-diagonal K=Ht matmul ----
        for _ in range(n_rest):
            w_ref, b_ref = refs[pos], refs[pos + 1]
            pos += 2
            z = jnp.dot(z.astype(mxu_dtype), w_ref[...],
                        preferred_element_type=jnp.float32)
            z = jnp.maximum(z + b_ref[...], 0.0)                        # Dropout = identity (eval)

        # --- InteractionAggregation, no h1/h2 split --------------------------------
        # out = wx.h1 + wy.h2 + b + sum_h h1_h^T W_h h2_h
        #     = sum_j z_j * ((z @ Wq)_j + wlin_j) + b
        wq_ref, wlin_ref = refs[pos], refs[pos + 1]
        out_ref = refs[pos + 2]
        t = jnp.dot(z.astype(mxu_dtype), wq_ref[...],
                    preferred_element_type=jnp.float32)
        out = jnp.sum(z * (t + wlin_ref[...]), axis=-1, keepdims=True) + b_out
        out_ref[...] = out.astype(out_ref.dtype)

    return kernel


def _bcast_spec(shape):
    nd = len(shape)
    return pl.BlockSpec(shape, lambda i, _nd=nd: (0,) * _nd)


# ----------------------------- parameter packing ------------------------------

def fold_and_pack_params(params, mxu_dtype=jnp.bfloat16):
    """Fold BN into (w,b), fold embedding+layer0 into Tall, block-diag the rest layers,
    pack InteractionAggregation into (Wq, wlin, b_out)."""

    def fold(layer):                                  # eval-mode BN: y = (x@w + b)*s + sh
        w, b, s, sh = layer
        return w * s, b * s + sh

    mlp1 = [fold(l) for l in params["mlp1"]]
    mlp2 = [fold(l) for l in params["mlp2"]]
    assert len(mlp1) == len(mlp2), "block-diagonal fusion needs equal branch depth"

    w1_0, b1_0 = mlp1[0]
    w2_0, b2_0 = mlp2[0]
    w0 = jnp.concatenate([w1_0, w2_0], axis=1)                          # (F*K, Ht0) f32
    b0 = jnp.concatenate([b1_0, b2_0], axis=1)                          # (1, Ht0)

    # Fold embedding gather + layer 0: each table row belongs to exactly one field, so
    # feat @ W0 == sum_f Tall[x_f + off_f]  with  Tall[r] = emb[r] @ W0[field(r)*K : ...].
    emb = params["embedding"]
    K = emb.shape[1]
    rows, start = [], 0
    for f, fd in enumerate(params["field_dims"]):
        rows.append(emb[start:start + fd] @ w0[f * K:(f + 1) * K, :])
        start += fd
    tall = jnp.concatenate(rows, axis=0)                                # (num_inputs, Ht0)

    packed = {"n_inputs": int(emb.shape[0]),
              "n_fields": len(params["field_dims"]),
              "tall": tall.astype(mxu_dtype),
              "b0": b0.astype(jnp.float32)}

    # Remaining layers: block-diagonal fusion (K = h1+h2, full MXU rows, no lane slicing).
    rest = []
    for (wa, ba), (wb, bb) in zip(mlp1[1:], mlp2[1:]):
        d1i, d1o = wa.shape
        d2i, d2o = wb.shape
        w = jnp.zeros((d1i + d2i, d1o + d2o), jnp.float32)
        w = w.at[:d1i, :d1o].set(wa)
        w = w.at[d1i:, d1o:].set(wb)
        rest.append((w.astype(mxu_dtype),
                     jnp.concatenate([ba, bb], axis=1).astype(jnp.float32)))
    packed["rest"] = rest

    # InteractionAggregation: per-head bilinear blocks in the upper-right quadrant of Wq.
    x_dim = mlp1[-1][0].shape[1]
    y_dim = mlp2[-1][0].shape[1]
    wxy = params["wxy"]                                                 # (H, hx, hy)
    H, hx, hy = wxy.shape
    wq = jnp.zeros((x_dim + y_dim, x_dim + y_dim), jnp.float32)
    for h in range(H):
        wq = wq.at[h * hx:(h + 1) * hx,
                   x_dim + h * hy:x_dim + (h + 1) * hy].set(wxy[h])
    packed["wq"] = wq.astype(mxu_dtype)
    packed["wlin"] = jnp.concatenate([params["wx"].T, params["wy"].T],
                                     axis=1).astype(jnp.float32)        # (1, Ht)
    packed["b_out"] = float(params["bx"][0, 0] + params["by"][0, 0])
    return packed


# ----------------------------- forward ----------------------------------------

def _pick_batch_tile(b_padded):
    """One big grid step on single-TC chips (v5e/v6e); even 'parallel' grid on dual-TC v7x."""
    try:
        kind = jax.devices()[0].device_kind.lower()
    except Exception:
        kind = ""
    dual_tc = ("v7" in kind) or ("tpu7" in kind)
    if dual_tc:
        bt = _round_up(max(8, -(-b_padded // 2)), 8)   # ceil(B/2) -> >=2 even grid steps
    else:
        bt = b_padded                                  # grid=(1,) whenever it fits
    return max(8, min(bt, 1024, b_padded))


def final_mlp_forward(x_idx, params, packed=None, *, batch_tile=None,
                      mxu_dtype=jnp.bfloat16):
    """Full FinalMLP forward (eval mode).  x_idx: int32 (B, num_fields) per-field indices."""
    if packed is None:
        packed = fold_and_pack_params(params, mxu_dtype)

    # glue (tiny int ops in XLA): global table row ids + pad batch to a multiple of 8
    idx = (x_idx + params["offsets"][None, :]).astype(jnp.int32)        # (B, F)
    B, F = idx.shape
    Bp = _round_up(B, 8)
    if Bp != B:
        idx = jnp.pad(idx, ((0, Bp - B), (0, 0)))

    bt = _pick_batch_tile(Bp) if batch_tile is None else batch_tile
    bt = max(8, min(_round_up(bt, 8), Bp))
    grid = (pl.cdiv(Bp, bt),)

    args = [idx, packed["tall"], packed["b0"]]
    in_specs = [pl.BlockSpec((bt, F), lambda i: (i, 0)),
                _bcast_spec(packed["tall"].shape),
                _bcast_spec(packed["b0"].shape)]
    for (w, b) in packed["rest"]:
        args += [w, b]
        in_specs += [_bcast_spec(w.shape), _bcast_spec(b.shape)]
    args += [packed["wq"], packed["wlin"]]
    in_specs += [_bcast_spec(packed["wq"].shape), _bcast_spec(packed["wlin"].shape)]

    kernel = make_final_mlp_kernel(len(packed["rest"]), packed["n_inputs"],
                                   packed["n_fields"], packed["b_out"], mxu_dtype)

    out = pl.pallas_call(
        kernel,
        out_shape=jax.ShapeDtypeStruct((Bp, 1), jnp.float32),
        grid=grid,
        in_specs=in_specs,
        out_specs=pl.BlockSpec((bt, 1), lambda i: (i, 0)),
        compiler_params=pltpu.CompilerParams(
            dimension_semantics=("parallel",),
            vmem_limit_bytes=16 * 1024 * 1024),
    )(*args)

    return out[:B, 0]   # y_pred.squeeze(-1)


# ----------------------------- parameter setup --------------------------------

def init_params(key, field_dims, num_factor, hidden1, hidden2, num_heads):
    num_inputs = sum(field_dims)
    keys = jax.random.split(key, 32)
    ki = iter(range(32))

    def xavier(k, shape, fan_in, fan_out):
        limit = math.sqrt(6.0 / (fan_in + fan_out))
        return jax.random.uniform(k, shape, jnp.float32, -limit, limit)

    params = {"field_dims": tuple(int(d) for d in field_dims)}
    params["embedding"] = xavier(keys[next(ki)], (num_inputs, num_factor),
                                 num_inputs, num_factor)
    params["offsets"] = jnp.concatenate(
        [jnp.zeros((1,), jnp.int32),
         jnp.cumsum(jnp.array(field_dims, jnp.int32))[:-1]])

    bn_eps = 1e-5

    def make_mlp(in_dim, sizes):
        layers = []
        d = in_dim
        for size in sizes:
            w = xavier(keys[next(ki)], (d, size), d, size)
            b = jnp.zeros((1, size), jnp.float32)
            # BatchNorm1d eval-mode: scale = gamma/sqrt(var+eps), shift = beta - mean*scale
            scale = jnp.full((1, size), 1.0 / math.sqrt(1.0 + bn_eps), jnp.float32)
            shift = jnp.zeros((1, size), jnp.float32)
            layers.append((w, b, scale, shift))
            d = size
        return layers

    D0 = num_factor * len(field_dims)
    params["mlp1"] = make_mlp(D0, hidden1)
    params["mlp2"] = make_mlp(D0, hidden2)

    x_dim, y_dim = hidden1[-1], hidden2[-1]
    hx, hy = x_dim // num_heads, y_dim // num_heads
    params["wx"] = xavier(keys[next(ki)], (x_dim, 1), x_dim, 1)
    params["bx"] = jnp.zeros((1, 1), jnp.float32)
    params["wy"] = xavier(keys[next(ki)], (y_dim, 1), y_dim, 1)
    params["by"] = jnp.zeros((1, 1), jnp.float32)
    # w_xy Parameter of shape (H*hx*hy, 1) viewed as (H, hx, hy) (output_dim == 1)
    std = math.sqrt(2.0 / (num_heads * hx * hy + 1))
    params["wxy"] = std * jax.random.normal(keys[next(ki)],
                                            (num_heads, hx, hy), jnp.float32)
    params["num_heads"] = num_heads
    return params


# ----------------------------- pure-JAX reference -----------------------------

def reference_forward(x_idx, params):
    emb = params["embedding"][x_idx + params["offsets"][None, :]]
    B = emb.shape[0]
    feat = emb.reshape(B, -1)

    def run(h, layers):
        for (w, b, s, sh) in layers:
            h = jnp.maximum((h @ w + b) * s + sh, 0.0)
        return h

    h1 = run(feat, params["mlp1"])
    h2 = run(feat, params["mlp2"])
    H = params["num_heads"]
    hx = h1.shape[1] // H
    hy = h2.shape[1] // H
    out = (h1 @ params["wx"] + params["bx"] + h2 @ params["wy"] + params["by"])[:, 0]
    xy = jnp.einsum("bhi,hij,bhj->b",
                    h1.reshape(B, H, hx), params["wxy"], h2.reshape(B, H, hy))
    return out + xy


# ----------------------------------- main --------------------------------------

if __name__ == "__main__":
    field_dims = [8, 12, 16]      # 3 fields, 36 table rows total
    num_factor = 8                # embedding dim -> flat feature dim 24
    hidden1 = [64, 64]
    hidden2 = [64, 64]
    num_heads = 4                 # 64 % 4 == 0 -> head dims 16
    batch = 512

    key = jax.random.PRNGKey(0)
    k_param, k_x = jax.random.split(key)
    params = init_params(k_param, field_dims, num_factor, hidden1, hidden2, num_heads)
    packed = fold_and_pack_params(params)

    # per-field categorical indices, each within its own field cardinality
    cols = []
    ks = jax.random.split(k_x, len(field_dims))
    for f, fd in enumerate(field_dims):
        cols.append(jax.random.randint(ks[f], (batch, 1), 0, fd, jnp.int32))
    x_idx = jnp.concatenate(cols, axis=1)     # (B, num_fields) int32

    y = final_mlp_forward(x_idx, params, packed)       # batch_tile auto-picked per device
    y = jax.block_until_ready(y)

    y_ref = reference_forward(x_idx, params)
    assert y.shape == (batch,)
    # bf16 MXU operands with f32 accumulation -> looser tolerance vs the f32 reference
    assert jnp.allclose(y, y_ref, atol=5e-2, rtol=5e-2), float(jnp.max(jnp.abs(y - y_ref)))

    print("KERNEL_OK")
</pallas_src>

<mosaic_0001>
module attributes {stable_mosaic.version = 11 : i64} {
  func.func @kernel(%arg0: i32, %arg1: memref<512x3xi32, #tpu.memory_space<vmem>>, %arg2: memref<36x128xbf16, #tpu.memory_space<vmem>>, %arg3: memref<1x128xf32, #tpu.memory_space<vmem>>, %arg4: memref<128x128xbf16, #tpu.memory_space<vmem>>, %arg5: memref<1x128xf32, #tpu.memory_space<vmem>>, %arg6: memref<128x128xbf16, #tpu.memory_space<vmem>>, %arg7: memref<1x128xf32, #tpu.memory_space<vmem>>, %arg8: memref<512x1xf32, #tpu.memory_space<vmem>>) attributes {dimension_semantics = [#tpu.dimension_semantics<parallel>], iteration_bounds = array<i64: 1>, scalar_prefetch = 0 : i64, scratch_operands = 0 : i64, tpu.core_type = #tpu.core_type<tc>, window_params = [{transform_indices = @transform_0, window_bounds = array<i64: 512, 3>}, {pipeline_mode = #tpu.pipeline_mode<synchronous>, transform_indices = @transform_1, window_bounds = array<i64: 36, 128>}, {pipeline_mode = #tpu.pipeline_mode<synchronous>, transform_indices = @transform_2, window_bounds = array<i64: 1, 128>}, {pipeline_mode = #tpu.pipeline_mode<synchronous>, transform_indices = @transform_3, window_bounds = array<i64: 128, 128>}, {pipeline_mode = #tpu.pipeline_mode<synchronous>, transform_indices = @transform_4, window_bounds = array<i64: 1, 128>}, {pipeline_mode = #tpu.pipeline_mode<synchronous>, transform_indices = @transform_5, window_bounds = array<i64: 128, 128>}, {pipeline_mode = #tpu.pipeline_mode<synchronous>, transform_indices = @transform_6, window_bounds = array<i64: 1, 128>}, {transform_indices = @transform_7, window_bounds = array<i64: 512, 1>}]} {
    %c0 = arith.constant 0 : index
    %c0_0 = arith.constant 0 : index
    %0 = vector.load %arg1[%c0, %c0_0] : memref<512x3xi32, #tpu.memory_space<vmem>>, vector<512x3xi32>
    %1 = tpu.iota {dimensions = array<i32: 1>} : vector<512x36xi32>
    %cst = arith.constant 0.000000e+00 : f32
    %2 = vector.broadcast %cst : f32 to vector<512x36xf32>
    %3 = vector.extract_strided_slice %0 {offsets = [0, 0], sizes = [512, 1], strides = [1, 1]} : vector<512x3xi32> to vector<512x1xi32>
    %4 = vector.broadcast %3 : vector<512x1xi32> to vector<512x36xi32>
    %5 = arith.cmpi eq, %1, %4 : vector<512x36xi32>
    %cst_1 = arith.constant 1.000000e+00 : f32
    %cst_2 = arith.constant 0.000000e+00 : f32
    %6 = vector.broadcast %cst_1 : f32 to vector<512x36xf32>
    %7 = vector.broadcast %cst_2 : f32 to vector<512x36xf32>
    %8 = arith.select %5, %6, %7 : vector<512x36xi1>, vector<512x36xf32>
    %9 = arith.addf %2, %8 : vector<512x36xf32>
    %10 = vector.extract_strided_slice %0 {offsets = [0, 1], sizes = [512, 1], strides = [1, 1]} : vector<512x3xi32> to vector<512x1xi32>
    %11 = vector.broadcast %10 : vector<512x1xi32> to vector<512x36xi32>
    %12 = arith.cmpi eq, %1, %11 : vector<512x36xi32>
    %cst_3 = arith.constant 1.000000e+00 : f32
    %cst_4 = arith.constant 0.000000e+00 : f32
    %13 = vector.broadcast %cst_3 : f32 to vector<512x36xf32>
    %14 = vector.broadcast %cst_4 : f32 to vector<512x36xf32>
    %15 = arith.select %12, %13, %14 : vector<512x36xi1>, vector<512x36xf32>
    %16 = arith.addf %9, %15 : vector<512x36xf32>
    %17 = vector.extract_strided_slice %0 {offsets = [0, 2], sizes = [512, 1], strides = [1, 1]} : vector<512x3xi32> to vector<512x1xi32>
    %18 = vector.broadcast %17 : vector<512x1xi32> to vector<512x36xi32>
    %19 = arith.cmpi eq, %1, %18 : vector<512x36xi32>
    %cst_5 = arith.constant 1.000000e+00 : f32
    %cst_6 = arith.constant 0.000000e+00 : f32
    %20 = vector.broadcast %cst_5 : f32 to vector<512x36xf32>
    %21 = vector.broadcast %cst_6 : f32 to vector<512x36xf32>
    %22 = arith.select %19, %20, %21 : vector<512x36xi1>, vector<512x36xf32>
    %23 = arith.addf %16, %22 : vector<512x36xf32>
    %24 = arith.truncf %23 : vector<512x36xf32> to vector<512x36xbf16>
    %c0_7 = arith.constant 0 : index
    %c0_8 = arith.constant 0 : index
    %25 = vector.load %arg2[%c0_7, %c0_8] : memref<36x128xbf16, #tpu.memory_space<vmem>>, vector<36x128xbf16>
    %cst_9 = arith.constant dense<0.000000e+00> : vector<512x128xf32>
    %26 = tpu.matmul %24, %25, %cst_9 {dimension_numbers = #tpu.dot_dimension_numbers<[1], [0], [0], [1], [0, 0, 1, 1], [], []>} : vector<512x36xbf16>, vector<36x128xbf16>, vector<512x128xf32> -> vector<512x128xf32>
    %c0_10 = arith.constant 0 : index
    %c0_11 = arith.constant 0 : index
    %27 = vector.load %arg3[%c0_10, %c0_11] : memref<1x128xf32, #tpu.memory_space<vmem>>, vector<1x128xf32>
    %28 = vector.broadcast %27 : vector<1x128xf32> to vector<512x128xf32>
    %29 = arith.addf %26, %28 : vector<512x128xf32>
    %cst_12 = arith.constant 0.000000e+00 : f32
    %30 = vector.broadcast %cst_12 : f32 to vector<512x128xf32>
    %31 = arith.maximumf %29, %30 : vector<512x128xf32>
    %32 = arith.truncf %31 : vector<512x128xf32> to vector<512x128xbf16>
    %c0_13 = arith.constant 0 : index
    %c0_14 = arith.constant 0 : index
    %33 = vector.load %arg4[%c0_13, %c0_14] : memref<128x128xbf16, #tpu.memory_space<vmem>>, vector<128x128xbf16>
    %cst_15 = arith.constant dense<0.000000e+00> : vector<512x128xf32>
    %34 = tpu.matmul %32, %33, %cst_15 {dimension_numbers = #tpu.dot_dimension_numbers<[1], [0], [0], [1], [0, 0, 1, 1], [], []>} : vector<512x128xbf16>, vector<128x128xbf16>, vector<512x128xf32> -> vector<512x128xf32>
    %c0_16 = arith.constant 0 : index
    %c0_17 = arith.constant 0 : index
    %35 = vector.load %arg5[%c0_16, %c0_17] : memref<1x128xf32, #tpu.memory_space<vmem>>, vector<1x128xf32>
    %36 = vector.broadcast %35 : vector<1x128xf32> to vector<512x128xf32>
    %37 = arith.addf %34, %36 : vector<512x128xf32>
    %cst_18 = arith.constant 0.000000e+00 : f32
    %38 = vector.broadcast %cst_18 : f32 to vector<512x128xf32>
    %39 = arith.maximumf %37, %38 : vector<512x128xf32>
    %40 = arith.truncf %39 : vector<512x128xf32> to vector<512x128xbf16>
    %c0_19 = arith.constant 0 : index
    %c0_20 = arith.constant 0 : index
    %41 = vector.load %arg6[%c0_19, %c0_20] : memref<128x128xbf16, #tpu.memory_space<vmem>>, vector<128x128xbf16>
    %cst_21 = arith.constant dense<0.000000e+00> : vector<512x128xf32>
    %42 = tpu.matmul %40, %41, %cst_21 {dimension_numbers = #tpu.dot_dimension_numbers<[1], [0], [0], [1], [0, 0, 1, 1], [], []>} : vector<512x128xbf16>, vector<128x128xbf16>, vector<512x128xf32> -> vector<512x128xf32>
    %c0_22 = arith.constant 0 : index
    %c0_23 = arith.constant 0 : index
    %43 = vector.load %arg7[%c0_22, %c0_23] : memref<1x128xf32, #tpu.memory_space<vmem>>, vector<1x128xf32>
    %44 = vector.broadcast %43 : vector<1x128xf32> to vector<512x128xf32>
    %45 = arith.addf %42, %44 : vector<512x128xf32>
    %46 = arith.mulf %39, %45 : vector<512x128xf32>
    %cst_24 = arith.constant dense<0.000000e+00> : vector<512xf32>
    %47 = vector.multi_reduction <add>, %46, %cst_24 [1] : vector<512x128xf32> to vector<512xf32>
    %48 = vector.shape_cast %47 : vector<512xf32> to vector<512x1xf32>
    %cst_25 = arith.constant 0.000000e+00 : f32
    %49 = vector.broadcast %cst_25 : f32 to vector<512x1xf32>
    %50 = arith.addf %48, %49 : vector<512x1xf32>
    %c0_26 = arith.constant 0 : index
    %c0_27 = arith.constant 0 : index
    %51 = vector.load %arg8[%c0_26, %c0_27] : memref<512x1xf32, #tpu.memory_space<vmem>>, vector<512x1xf32>
    tpu.vector_store %arg8[%c0_26, %c0_27], %50 {strides = array<i32>} : memref<512x1xf32, #tpu.memory_space<vmem>>, vector<512x1xf32>,
    return
  }
  func.func @transform_0(%arg0: i32) -> (i32, i32) {
    %c0_i32 = arith.constant 0 : i32
    %c0_i32_0 = arith.constant 0 : i32
    return %arg0, %c0_i32 : i32, i32
  }
  func.func @transform_1(%arg0: i32) -> (i32, i32) {
    %c0_i32 = arith.constant 0 : i32
    %c0_i32_0 = arith.constant 0 : i32
    %c0_i32_1 = arith.constant 0 : i32
    return %c0_i32, %c0_i32_0 : i32, i32
  }
  func.func @transform_2(%arg0: i32) -> (i32, i32) {
    %c0_i32 = arith.constant 0 : i32
    %c0_i32_0 = arith.constant 0 : i32
    %c0_i32_1 = arith.constant 0 : i32
    return %c0_i32, %c0_i32_0 : i32, i32
  }
  func.func @transform_3(%arg0: i32) -> (i32, i32) {
    %c0_i32 = arith.constant 0 : i32
    %c0_i32_0 = arith.constant 0 : i32
    %c0_i32_1 = arith.constant 0 : i32
    return %c0_i32, %c0_i32_0 : i32, i32
  }
  func.func @transform_4(%arg0: i32) -> (i32, i32) {
    %c0_i32 = arith.constant 0 : i32
    %c0_i32_0 = arith.constant 0 : i32
    %c0_i32_1 = arith.constant 0 : i32
    return %c0_i32, %c0_i32_0 : i32, i32
  }
  func.func @transform_5(%arg0: i32) -> (i32, i32) {
    %c0_i32 = arith.constant 0 : i32
    %c0_i32_0 = arith.constant 0 : i32
    %c0_i32_1 = arith.constant 0 : i32
    return %c0_i32, %c0_i32_0 : i32, i32
  }
  func.func @transform_6(%arg0: i32) -> (i32, i32) {
    %c0_i32 = arith.constant 0 : i32
    %c0_i32_0 = arith.constant 0 : i32
    %c0_i32_1 = arith.constant 0 : i32
    return %c0_i32, %c0_i32_0 : i32, i32
  }
  func.func @transform_7(%arg0: i32) -> (i32, i32) {
    %c0_i32 = arith.constant 0 : i32
    %c0_i32_0 = arith.constant 0 : i32
    return %arg0, %c0_i32 : i32, i32
  }
}

</mosaic_0001>

<llo_original>
// kernel: tpu_custom_call.1
$region0: #{tpu_custom_call.1}
  #allocation0 [shape = 'u32[]', space=smem, size = 0x4, offset = 0x4, fixed_abs, tag = 'smem constant byte address 0x4 - core index']
  #allocation1 [shape = 'u32[144,128]{1,0:T(1,128)}', space=vmem, size = 0x12000, scoped, tag = 'internal scratch']
  %s0 = inlined_call_operand.vmem [shape: s32[512,3], index: 0, kind: input, shape index: {}]
  %s1 = inlined_call_operand.vmem [shape: bf16[36,128], index: 1, kind: input, shape index: {}]
  %s2 = inlined_call_operand.vmem [shape: f32[1,128], index: 2, kind: input, shape index: {}]
  %s3 = inlined_call_operand.vmem [shape: bf16[128,128], index: 3, kind: input, shape index: {}]
  %s4 = inlined_call_operand.vmem [shape: f32[1,128], index: 4, kind: input, shape index: {}]
  %s5 = inlined_call_operand.vmem [shape: bf16[128,128], index: 5, kind: input, shape index: {}]
  %s6 = inlined_call_operand.vmem [shape: f32[1,128], index: 6, kind: input, shape index: {}]
  %s7 = inlined_call_operand.vmem [shape: f32[512,1], index: 7, kind: output, shape index: {}]
  %s8 = sld [smem:[#allocation0]]
  $region38: #{tpu_custom_call.1} parent=0
    _
  %s10 = ssub.s32 1, %s8
  %s11 = scalar_select 0, %s10, %s8
  // Predicated region
  $region2: #{tpu_custom_call.1} parent=0 // pred_check
    _
  $region3: #{tpu_custom_call.1} parent=0 // pred_check_branch
    %13 = sbr.rel (0) target = $region5
  $region4: #{tpu_custom_call.1} parent=0 // pred_region
    _
  $region5: #{tpu_custom_call.1} parent=0 // pred_fallthru
    _
  // Predicated region
  $region6: #{tpu_custom_call.1} parent=0 // pred_check
    _
  $region7: #{tpu_custom_call.1} parent=0 // pred_check_branch
    %15 = sbr.rel (0) target = $region9
  $region8: #{tpu_custom_call.1} parent=0 // pred_region
    _
  $region9: #{tpu_custom_call.1} parent=0 // pred_fallthru
    _
  // Predicated region
  $region10: #{tpu_custom_call.1} parent=0 // pred_check
    _
  $region11: #{tpu_custom_call.1} parent=0 // pred_check_branch
    %17 = sbr.rel (0) target = $region13
  $region12: #{tpu_custom_call.1} parent=0 // pred_region
    _
  $region13: #{tpu_custom_call.1} parent=0 // pred_fallthru
    _
  // Predicated region
  $region14: #{tpu_custom_call.1} parent=0 // pred_check
    _
  $region15: #{tpu_custom_call.1} parent=0 // pred_check_branch
    %19 = sbr.rel (0) target = $region17
  $region16: #{tpu_custom_call.1} parent=0 // pred_region
    _
  $region17: #{tpu_custom_call.1} parent=0 // pred_fallthru
    _
  // Predicated region
  $region18: #{tpu_custom_call.1} parent=0 // pred_check
    _
  $region19: #{tpu_custom_call.1} parent=0 // pred_check_branch
    %21 = sbr.rel (0) target = $region21
  $region20: #{tpu_custom_call.1} parent=0 // pred_region
    _
  $region21: #{tpu_custom_call.1} parent=0 // pred_fallthru
    _
  // Predicated region
  $region22: #{tpu_custom_call.1} parent=0 // pred_check
    _
  $region23: #{tpu_custom_call.1} parent=0 // pred_check_branch
    %23 = sbr.rel (0) target = $region25
  $region24: #{tpu_custom_call.1} parent=0 // pred_region
    _
  $region25: #{tpu_custom_call.1} parent=0 // pred_fallthru
    _
  // Predicated region
  $region26: #{tpu_custom_call.1} parent=0 // pred_check
    _
  $region27: #{tpu_custom_call.1} parent=0 // pred_check_branch
    %25 = sbr.rel (0) target = $region29
  $region28: #{tpu_custom_call.1} parent=0 // pred_region
    _
  $region29: #{tpu_custom_call.1} parent=0 // pred_fallthru
    _
  %v27 = vld [vmem:[%s0] sm:$0xff]
  %v28 = vld [vmem:[%s0 + $0x8] sm:$0xff]
  %v29 = vld [vmem:[%s0 + $0x10] sm:$0xff]
  %v30 = vld [vmem:[%s0 + $0x18] sm:$0xff]
  %v31 = vld [vmem:[%s0 + $0x20] sm:$0xff]
  %v32 = vld [vmem:[%s0 + $0x28] sm:$0xff]
  %v33 = vld [vmem:[%s0 + $0x30] sm:$0xff]
  %v34 = vld [vmem:[%s0 + $0x38] sm:$0xff]
  %v35 = vld [vmem:[%s0 + $0x40] sm:$0xff]
  %v36 = vld [vmem:[%s0 + $0x48] sm:$0xff]
  %v37 = vld [vmem:[%s0 + $0x50] sm:$0xff]
  %v38 = vld [vmem:[%s0 + $0x58] sm:$0xff]
  %v39 = vld [vmem:[%s0 + $0x60] sm:$0xff]
  %v40 = vld [vmem:[%s0 + $0x68] sm:$0xff]
  %v41 = vld [vmem:[%s0 + $0x70] sm:$0xff]
  %v42 = vld [vmem:[%s0 + $0x78] sm:$0xff]
  %v43 = vld [vmem:[%s0 + $0x80] sm:$0xff]
  %v44 = vld [vmem:[%s0 + $0x88] sm:$0xff]
  %v45 = vld [vmem:[%s0 + $0x90] sm:$0xff]
  %v46 = vld [vmem:[%s0 + $0x98] sm:$0xff]
  %v47 = vld [vmem:[%s0 + $0xa0] sm:$0xff]
  %v48 = vld [vmem:[%s0 + $0xa8] sm:$0xff]
  %v49 = vld [vmem:[%s0 + $0xb0] sm:$0xff]
  %v50 = vld [vmem:[%s0 + $0xb8] sm:$0xff]
  %v51 = vld [vmem:[%s0 + $0xc0] sm:$0xff]
  %v52 = vld [vmem:[%s0 + $0xc8] sm:$0xff]
  %v53 = vld [vmem:[%s0 + $0xd0] sm:$0xff]
  %v54 = vld [vmem:[%s0 + $0xd8] sm:$0xff]
  %v55 = vld [vmem:[%s0 + $0xe0] sm:$0xff]
  %v56 = vld [vmem:[%s0 + $0xe8] sm:$0xff]
  %v57 = vld [vmem:[%s0 + $0xf0] sm:$0xff]
  %v58 = vld [vmem:[%s0 + $0xf8] sm:$0xff]
  %v59 = vld [vmem:[%s0 + $0x100] sm:$0xff]
  %v60 = vld [vmem:[%s0 + $0x108] sm:$0xff]
  %v61 = vld [vmem:[%s0 + $0x110] sm:$0xff]
  %v62 = vld [vmem:[%s0 + $0x118] sm:$0xff]
  %v63 = vld [vmem:[%s0 + $0x120] sm:$0xff]
  %v64 = vld [vmem:[%s0 + $0x128] sm:$0xff]
  %v65 = vld [vmem:[%s0 + $0x130] sm:$0xff]
  %v66 = vld [vmem:[%s0 + $0x138] sm:$0xff]
  %v67 = vld [vmem:[%s0 + $0x140] sm:$0xff]
  %v68 = vld [vmem:[%s0 + $0x148] sm:$0xff]
  %v69 = vld [vmem:[%s0 + $0x150] sm:$0xff]
  %v70 = vld [vmem:[%s0 + $0x158] sm:$0xff]
  %v71 = vld [vmem:[%s0 + $0x160] sm:$0xff]
  %v72 = vld [vmem:[%s0 + $0x168] sm:$0xff]
  %v73 = vld [vmem:[%s0 + $0x170] sm:$0xff]
  %v74 = vld [vmem:[%s0 + $0x178] sm:$0xff]
  %v75 = vld [vmem:[%s0 + $0x180] sm:$0xff]
  %v76 = vld [vmem:[%s0 + $0x188] sm:$0xff]
  %v77 = vld [vmem:[%s0 + $0x190] sm:$0xff]
  %v78 = vld [vmem:[%s0 + $0x198] sm:$0xff]
  %v79 = vld [vmem:[%s0 + $0x1a0] sm:$0xff]
  %v80 = vld [vmem:[%s0 + $0x1a8] sm:$0xff]
  %v81 = vld [vmem:[%s0 + $0x1b0] sm:$0xff]
  %v82 = vld [vmem:[%s0 + $0x1b8] sm:$0xff]
  %v83 = vld [vmem:[%s0 + $0x1c0] sm:$0xff]
  %v84 = vld [vmem:[%s0 + $0x1c8] sm:$0xff]
  %v85 = vld [vmem:[%s0 + $0x1d0] sm:$0xff]
  %v86 = vld [vmem:[%s0 + $0x1d8] sm:$0xff]
  %v87 = vld [vmem:[%s0 + $0x1e0] sm:$0xff]
  %v88 = vld [vmem:[%s0 + $0x1e8] sm:$0xff]
  %v89 = vld [vmem:[%s0 + $0x1f0] sm:$0xff]
  %v90 = vld [vmem:[%s0 + $0x1f8] sm:$0xff]
  %v91 = vlaneseq
  %v92 = vand.u32 %v91, 127
  %93 = vset.pattern.permute.xlu0 0
  %94 = vperm.xlu0 %93, %v27
  %v95 = vpop.permute.xlu0 %94
  %96 = vset.pattern.permute.xlu0 0
  %97 = vperm.xlu0 %96, %v28
  %v98 = vpop.permute.xlu0 %97
  %99 = vset.pattern.permute.xlu0 0
  %100 = vperm.xlu0 %99, %v29
  %v101 = vpop.permute.xlu0 %100
  %102 = vset.pattern.permute.xlu0 0
  %103 = vperm.xlu0 %102, %v30
  %v104 = vpop.permute.xlu0 %103
  %105 = vset.pattern.permute.xlu0 0
  %106 = vperm.xlu0 %105, %v31
  %v107 = vpop.permute.xlu0 %106
  %108 = vset.pattern.permute.xlu0 0
  %109 = vperm.xlu0 %108, %v32
  %v110 = vpop.permute.xlu0 %109
  %111 = vset.pattern.permute.xlu0 0
  %112 = vperm.xlu0 %111, %v33
  %v113 = vpop.permute.xlu0 %112
  %114 = vset.pattern.permute.xlu0 0
  %115 = vperm.xlu0 %114, %v34
  %v116 = vpop.permute.xlu0 %115
  %117 = vset.pattern.permute.xlu0 0
  %118 = vperm.xlu0 %117, %v35
  %v119 = vpop.permute.xlu0 %118
  %120 = vset.pattern.permute.xlu0 0
  %121 = vperm.xlu0 %120, %v36
  %v122 = vpop.permute.xlu0 %121
  %123 = vset.pattern.permute.xlu0 0
  %124 = vperm.xlu0 %123, %v37
  %v125 = vpop.permute.xlu0 %124
  %126 = vset.pattern.permute.xlu0 0
  %127 = vperm.xlu0 %126, %v38
  %v128 = vpop.permute.xlu0 %127
  %129 = vset.pattern.permute.xlu0 0
  %130 = vperm.xlu0 %129, %v39
  %v131 = vpop.permute.xlu0 %130
  %132 = vset.pattern.permute.xlu0 0
  %133 = vperm.xlu0 %132, %v40
  %v134 = vpop.permute.xlu0 %133
  %135 = vset.pattern.permute.xlu0 0
  %136 = vperm.xlu0 %135, %v41
  %v137 = vpop.permute.xlu0 %136
  %138 = vset.pattern.permute.xlu0 0
  %139 = vperm.xlu0 %138, %v42
  %v140 = vpop.permute.xlu0 %139
  %141 = vset.pattern.permute.xlu0 0
  %142 = vperm.xlu0 %141, %v43
  %v143 = vpop.permute.xlu0 %142
  %144 = vset.pattern.permute.xlu0 0
  %145 = vperm.xlu0 %144, %v44
  %v146 = vpop.permute.xlu0 %145
  %147 = vset.pattern.permute.xlu0 0
  %148 = vperm.xlu0 %147, %v45
  %v149 = vpop.permute.xlu0 %148
  %150 = vset.pattern.permute.xlu0 0
  %151 = vperm.xlu0 %150, %v46
  %v152 = vpop.permute.xlu0 %151
  %153 = vset.pattern.permute.xlu0 0
  %154 = vperm.xlu0 %153, %v47
  %v155 = vpop.permute.xlu0 %154
  %156 = vset.pattern.permute.xlu0 0
  %157 = vperm.xlu0 %156, %v48
  %v158 = vpop.permute.xlu0 %157
  %159 = vset.pattern.permute.xlu0 0
  %160 = vperm.xlu0 %159, %v49
  %v161 = vpop.permute.xlu0 %160
  %162 = vset.pattern.permute.xlu0 0
  %163 = vperm.xlu0 %162, %v50
  %v164 = vpop.permute.xlu0 %163
  %165 = vset.pattern.permute.xlu0 0
  %166 = vperm.xlu0 %165, %v51
  %v167 = vpop.permute.xlu0 %166
  %168 = vset.pattern.permute.xlu0 0
  %169 = vperm.xlu0 %168, %v52
  %v170 = vpop.permute.xlu0 %169
  %171 = vset.pattern.permute.xlu0 0
  %172 = vperm.xlu0 %171, %v53
  %v173 = vpop.permute.xlu0 %172
  %174 = vset.pattern.permute.xlu0 0
  %175 = vperm.xlu0 %174, %v54
  %v176 = vpop.permute.xlu0 %175
  %177 = vset.pattern.permute.xlu0 0
  %178 = vperm.xlu0 %177, %v55
  %v179 = vpop.permute.xlu0 %178
  %180 = vset.pattern.permute.xlu0 0
  %181 = vperm.xlu0 %180, %v56
  %v182 = vpop.permute.xlu0 %181
  %183 = vset.pattern.permute.xlu0 0
  %184 = vperm.xlu0 %183, %v57
  %v185 = vpop.permute.xlu0 %184
  %186 = vset.pattern.permute.xlu0 0
  %187 = vperm.xlu0 %186, %v58
  %v188 = vpop.permute.xlu0 %187
  %189 = vset.pattern.permute.xlu0 0
  %190 = vperm.xlu0 %189, %v59
  %v191 = vpop.permute.xlu0 %190
  %192 = vset.pattern.permute.xlu0 0
  %193 = vperm.xlu0 %192, %v60
  %v194 = vpop.permute.xlu0 %193
  %195 = vset.pattern.permute.xlu0 0
  %196 = vperm.xlu0 %195, %v61
  %v197 = vpop.permute.xlu0 %196
  %198 = vset.pattern.permute.xlu0 0
  %199 = vperm.xlu0 %198, %v62
  %v200 = vpop.permute.xlu0 %199
  %201 = vset.pattern.permute.xlu0 0
  %202 = vperm.xlu0 %201, %v63
  %v203 = vpop.permute.xlu0 %202
  %204 = vset.pattern.permute.xlu0 0
  %205 = vperm.xlu0 %204, %v64
  %v206 = vpop.permute.xlu0 %205
  %207 = vset.pattern.permute.xlu0 0
  %208 = vperm.xlu0 %207, %v65
  %v209 = vpop.permute.xlu0 %208
  %210 = vset.pattern.permute.xlu0 0
  %211 = vperm.xlu0 %210, %v66
  %v212 = vpop.permute.xlu0 %211
  %213 = vset.pattern.permute.xlu0 0
  %214 = vperm.xlu0 %213, %v67
  %v215 = vpop.permute.xlu0 %214
  %216 = vset.pattern.permute.xlu0 0
  %217 = vperm.xlu0 %216, %v68
  %v218 = vpop.permute.xlu0 %217
  %219 = vset.pattern.permute.xlu0 0
  %220 = vperm.xlu0 %219, %v69
  %v221 = vpop.permute.xlu0 %220
  %222 = vset.pattern.permute.xlu0 0
  %223 = vperm.xlu0 %222, %v70
  %v224 = vpop.permute.xlu0 %223
  %225 = vset.pattern.permute.xlu0 0
  %226 = vperm.xlu0 %225, %v71
  %v227 = vpop.permute.xlu0 %226
  %228 = vset.pattern.permute.xlu0 0
  %229 = vperm.xlu0 %228, %v72
  %v230 = vpop.permute.xlu0 %229
  %231 = vset.pattern.permute.xlu0 0
  %232 = vperm.xlu0 %231, %v73
  %v233 = vpop.permute.xlu0 %232
  %234 = vset.pattern.permute.xlu0 0
  %235 = vperm.xlu0 %234, %v74
  %v236 = vpop.permute.xlu0 %235
  %237 = vset.pattern.permute.xlu0 0
  %238 = vperm.xlu0 %237, %v75
  %v239 = vpop.permute.xlu0 %238
  %240 = vset.pattern.permute.xlu0 0
  %241 = vperm.xlu0 %240, %v76
  %v242 = vpop.permute.xlu0 %241
  %243 = vset.pattern.permute.xlu0 0
  %244 = vperm.xlu0 %243, %v77
  %v245 = vpop.permute.xlu0 %244
  %246 = vset.pattern.permute.xlu0 0
  %247 = vperm.xlu0 %246, %v78
  %v248 = vpop.permute.xlu0 %247
  %249 = vset.pattern.permute.xlu0 0
  %250 = vperm.xlu0 %249, %v79
  %v251 = vpop.permute.xlu0 %250
  %252 = vset.pattern.permute.xlu0 0
  %253 = vperm.xlu0 %252, %v80
  %v254 = vpop.permute.xlu0 %253
  %255 = vset.pattern.permute.xlu0 0
  %256 = vperm.xlu0 %255, %v81
  %v257 = vpop.permute.xlu0 %256
  %258 = vset.pattern.permute.xlu0 0
  %259 = vperm.xlu0 %258, %v82
  %v260 = vpop.permute.xlu0 %259
  %261 = vset.pattern.permute.xlu0 0
  %262 = vperm.xlu0 %261, %v83
  %v263 = vpop.permute.xlu0 %262
  %264 = vset.pattern.permute.xlu0 0
  %265 = vperm.xlu0 %264, %v84
  %v266 = vpop.permute.xlu0 %265
  %267 = vset.pattern.permute.xlu0 0
  %268 = vperm.xlu0 %267, %v85
  %v269 = vpop.permute.xlu0 %268
  %270 = vset.pattern.permute.xlu0 0
  %271 = vperm.xlu0 %270, %v86
  %v272 = vpop.permute.xlu0 %271
  %273 = vset.pattern.permute.xlu0 0
  %274 = vperm.xlu0 %273, %v87
  %v275 = vpop.permute.xlu0 %274
  %276 = vset.pattern.permute.xlu0 0
  %277 = vperm.xlu0 %276, %v88
  %v278 = vpop.permute.xlu0 %277
  %279 = vset.pattern.permute.xlu0 0
  %280 = vperm.xlu0 %279, %v89
  %v281 = vpop.permute.xlu0 %280
  %282 = vset.pattern.permute.xlu0 0
  %283 = vperm.xlu0 %282, %v90
  %v284 = vpop.permute.xlu0 %283
  %vm285 = vcmp.eq.s32.totalorder %v92, %v95
  %vm286 = vcmp.eq.s32.totalorder %v92, %v98
  %vm287 = vcmp.eq.s32.totalorder %v92, %v101
  %vm288 = vcmp.eq.s32.totalorder %v92, %v104
  %vm289 = vcmp.eq.s32.totalorder %v92, %v107
  %vm290 = vcmp.eq.s32.totalorder %v92, %v110
  %vm291 = vcmp.eq.s32.totalorder %v92, %v113
  %vm292 = vcmp.eq.s32.totalorder %v92, %v116
  %vm293 = vcmp.eq.s32.totalorder %v92, %v119
  %vm294 = vcmp.eq.s32.totalorder %v92, %v122
  %vm295 = vcmp.eq.s32.totalorder %v92, %v125
  %vm296 = vcmp.eq.s32.totalorder %v92, %v128
  %vm297 = vcmp.eq.s32.totalorder %v92, %v131
  %vm298 = vcmp.eq.s32.totalorder %v92, %v134
  %vm299 = vcmp.eq.s32.totalorder %v92, %v137
  %vm300 = vcmp.eq.s32.totalorder %v92, %v140
  %vm301 = vcmp.eq.s32.totalorder %v92, %v143
  %vm302 = vcmp.eq.s32.totalorder %v92, %v146
  %vm303 = vcmp.eq.s32.totalorder %v92, %v149
  %vm304 = vcmp.eq.s32.totalorder %v92, %v152
  %vm305 = vcmp.eq.s32.totalorder %v92, %v155
  %vm306 = vcmp.eq.s32.totalorder %v92, %v158
  %vm307 = vcmp.eq.s32.totalorder %v92, %v161
  %vm308 = vcmp.eq.s32.totalorder %v92, %v164
  %vm309 = vcmp.eq.s32.totalorder %v92, %v167
  %vm310 = vcmp.eq.s32.totalorder %v92, %v170
  %vm311 = vcmp.eq.s32.totalorder %v92, %v173
  %vm312 = vcmp.eq.s32.totalorder %v92, %v176
  %vm313 = vcmp.eq.s32.totalorder %v92, %v179
  %vm314 = vcmp.eq.s32.totalorder %v92, %v182
  %vm315 = vcmp.eq.s32.totalorder %v92, %v185
  %vm316 = vcmp.eq.s32.totalorder %v92, %v188
  %vm317 = vcmp.eq.s32.totalorder %v92, %v191
  %vm318 = vcmp.eq.s32.totalorder %v92, %v194
  %vm319 = vcmp.eq.s32.totalorder %v92, %v197
  %vm320 = vcmp.eq.s32.totalorder %v92, %v200
  %vm321 = vcmp.eq.s32.totalorder %v92, %v203
  %vm322 = vcmp.eq.s32.totalorder %v92, %v206
  %vm323 = vcmp.eq.s32.totalorder %v92, %v209
  %vm324 = vcmp.eq.s32.totalorder %v92, %v212
  %vm325 = vcmp.eq.s32.totalorder %v92, %v215
  %vm326 = vcmp.eq.s32.totalorder %v92, %v218
  %vm327 = vcmp.eq.s32.totalorder %v92, %v221
  %vm328 = vcmp.eq.s32.totalorder %v92, %v224
  %vm329 = vcmp.eq.s32.totalorder %v92, %v227
  %vm330 = vcmp.eq.s32.totalorder %v92, %v230
  %vm331 = vcmp.eq.s32.totalorder %v92, %v233
  %vm332 = vcmp.eq.s32.totalorder %v92, %v236
  %vm333 = vcmp.eq.s32.totalorder %v92, %v239
  %vm334 = vcmp.eq.s32.totalorder %v92, %v242
  %vm335 = vcmp.eq.s32.totalorder %v92, %v245
  %vm336 = vcmp.eq.s32.totalorder %v92, %v248
  %vm337 = vcmp.eq.s32.totalorder %v92, %v251
  %vm338 = vcmp.eq.s32.totalorder %v92, %v254
  %vm339 = vcmp.eq.s32.totalorder %v92, %v257
  %vm340 = vcmp.eq.s32.totalorder %v92, %v260
  %vm341 = vcmp.eq.s32.totalorder %v92, %v263
  %vm342 = vcmp.eq.s32.totalorder %v92, %v266
  %vm343 = vcmp.eq.s32.totalorder %v92, %v269
  %vm344 = vcmp.eq.s32.totalorder %v92, %v272
  %vm345 = vcmp.eq.s32.totalorder %v92, %v275
  %vm346 = vcmp.eq.s32.totalorder %v92, %v278
  %vm347 = vcmp.eq.s32.totalorder %v92, %v281
  %vm348 = vcmp.eq.s32.totalorder %v92, %v284
  %v349 = vsel %vm285, 1.0, 0.0
  %v350 = vsel %vm286, 1.0, 0.0
  %v351 = vsel %vm287, 1.0, 0.0
  %v352 = vsel %vm288, 1.0, 0.0
  %v353 = vsel %vm289, 1.0, 0.0
  %v354 = vsel %vm290, 1.0, 0.0
  %v355 = vsel %vm291, 1.0, 0.0
  %v356 = vsel %vm292, 1.0, 0.0
  %v357 = vsel %vm293, 1.0, 0.0
  %v358 = vsel %vm294, 1.0, 0.0
  %v359 = vsel %vm295, 1.0, 0.0
  %v360 = vsel %vm296, 1.0, 0.0
  %v361 = vsel %vm297, 1.0, 0.0
  %v362 = vsel %vm298, 1.0, 0.0
  %v363 = vsel %vm299, 1.0, 0.0
  %v364 = vsel %vm300, 1.0, 0.0
  %v365 = vsel %vm301, 1.0, 0.0
  %v366 = vsel %vm302, 1.0, 0.0
  %v367 = vsel %vm303, 1.0, 0.0
  %v368 = vsel %vm304, 1.0, 0.0
  %v369 = vsel %vm305, 1.0, 0.0
  %v370 = vsel %vm306, 1.0, 0.0
  %v371 = vsel %vm307, 1.0, 0.0
  %v372 = vsel %vm308, 1.0, 0.0
  %v373 = vsel %vm309, 1.0, 0.0
  %v374 = vsel %vm310, 1.0, 0.0
  %v375 = vsel %vm311, 1.0, 0.0
  %v376 = vsel %vm312, 1.0, 0.0
  %v377 = vsel %vm313, 1.0, 0.0
  %v378 = vsel %vm314, 1.0, 0.0
  %v379 = vsel %vm315, 1.0, 0.0
  %v380 = vsel %vm316, 1.0, 0.0
  %v381 = vsel %vm317, 1.0, 0.0
  %v382 = vsel %vm318, 1.0, 0.0
  %v383 = vsel %vm319, 1.0, 0.0
  %v384 = vsel %vm320, 1.0, 0.0
  %v385 = vsel %vm321, 1.0, 0.0
  %v386 = vsel %vm322, 1.0, 0.0
  %v387 = vsel %vm323, 1.0, 0.0
  %v388 = vsel %vm324, 1.0, 0.0
  %v389 = vsel %vm325, 1.0, 0.0
  %v390 = vsel %vm326, 1.0, 0.0
  %v391 = vsel %vm327, 1.0, 0.0
  %v392 = vsel %vm328, 1.0, 0.0
  %v393 = vsel %vm329, 1.0, 0.0
  %v394 = vsel %vm330, 1.0, 0.0
  %v395 = vsel %vm331, 1.0, 0.0
  %v396 = vsel %vm332, 1.0, 0.0
  %v397 = vsel %vm333, 1.0, 0.0
  %v398 = vsel %vm334, 1.0, 0.0
  %v399 = vsel %vm335, 1.0, 0.0
  %v400 = vsel %vm336, 1.0, 0.0
  %v401 = vsel %vm337, 1.0, 0.0
  %v402 = vsel %vm338, 1.0, 0.0
  %v403 = vsel %vm339, 1.0, 0.0
  %v404 = vsel %vm340, 1.0, 0.0
  %v405 = vsel %vm341, 1.0, 0.0
  %v406 = vsel %vm342, 1.0, 0.0
  %v407 = vsel %vm343, 1.0, 0.0
  %v408 = vsel %vm344, 1.0, 0.0
  %v409 = vsel %vm345, 1.0, 0.0
  %v410 = vsel %vm346, 1.0, 0.0
  %v411 = vsel %vm347, 1.0, 0.0
  %v412 = vsel %vm348, 1.0, 0.0
  %v413 = vadd.f32 %v349, 0.0
  %v414 = vadd.f32 %v350, 0.0
  %v415 = vadd.f32 %v351, 0.0
  %v416 = vadd.f32 %v352, 0.0
  %v417 = vadd.f32 %v353, 0.0
  %v418 = vadd.f32 %v354, 0.0
  %v419 = vadd.f32 %v355, 0.0
  %v420 = vadd.f32 %v356, 0.0
  %v421 = vadd.f32 %v357, 0.0
  %v422 = vadd.f32 %v358, 0.0
  %v423 = vadd.f32 %v359, 0.0
  %v424 = vadd.f32 %v360, 0.0
  %v425 = vadd.f32 %v361, 0.0
  %v426 = vadd.f32 %v362, 0.0
  %v427 = vadd.f32 %v363, 0.0
  %v428 = vadd.f32 %v364, 0.0
  %v429 = vadd.f32 %v365, 0.0
  %v430 = vadd.f32 %v366, 0.0
  %v431 = vadd.f32 %v367, 0.0
  %v432 = vadd.f32 %v368, 0.0
  %v433 = vadd.f32 %v369, 0.0
  %v434 = vadd.f32 %v370, 0.0
  %v435 = vadd.f32 %v371, 0.0
  %v436 = vadd.f32 %v372, 0.0
  %v437 = vadd.f32 %v373, 0.0
  %v438 = vadd.f32 %v374, 0.0
  %v439 = vadd.f32 %v375, 0.0
  %v440 = vadd.f32 %v376, 0.0
  %v441 = vadd.f32 %v377, 0.0
  %v442 = vadd.f32 %v378, 0.0
  %v443 = vadd.f32 %v379, 0.0
  %v444 = vadd.f32 %v380, 0.0
  %v445 = vadd.f32 %v381, 0.0
  %v446 = vadd.f32 %v382, 0.0
  %v447 = vadd.f32 %v383, 0.0
  %v448 = vadd.f32 %v384, 0.0
  %v449 = vadd.f32 %v385, 0.0
  %v450 = vadd.f32 %v386, 0.0
  %v451 = vadd.f32 %v387, 0.0
  %v452 = vadd.f32 %v388, 0.0
  %v453 = vadd.f32 %v389, 0.0
  %v454 = vadd.f32 %v390, 0.0
  %v455 = vadd.f32 %v391, 0.0
  %v456 = vadd.f32 %v392, 0.0
  %v457 = vadd.f32 %v393, 0.0
  %v458 = vadd.f32 %v394, 0.0
  %v459 = vadd.f32 %v395, 0.0
  %v460 = vadd.f32 %v396, 0.0
  %v461 = vadd.f32 %v397, 0.0
  %v462 = vadd.f32 %v398, 0.0
  %v463 = vadd.f32 %v399, 0.0
  %v464 = vadd.f32 %v400, 0.0
  %v465 = vadd.f32 %v401, 0.0
  %v466 = vadd.f32 %v402, 0.0
  %v467 = vadd.f32 %v403, 0.0
  %v468 = vadd.f32 %v404, 0.0
  %v469 = vadd.f32 %v405, 0.0
  %v470 = vadd.f32 %v406, 0.0
  %v471 = vadd.f32 %v407, 0.0
  %v472 = vadd.f32 %v408, 0.0
  %v473 = vadd.f32 %v409, 0.0
  %v474 = vadd.f32 %v410, 0.0
  %v475 = vadd.f32 %v411, 0.0
  %v476 = vadd.f32 %v412, 0.0
  %477 = vset.pattern.permute.xlu0 1
  %478 = vperm.xlu0 %477, %v27
  %v479 = vpop.permute.xlu0 %478
  %480 = vset.pattern.permute.xlu0 1
  %481 = vperm.xlu0 %480, %v28
  %v482 = vpop.permute.xlu0 %481
  %483 = vset.pattern.permute.xlu0 1
  %484 = vperm.xlu0 %483, %v29
  %v485 = vpop.permute.xlu0 %484
  %486 = vset.pattern.permute.xlu0 1
  %487 = vperm.xlu0 %486, %v30
  %v488 = vpop.permute.xlu0 %487
  %489 = vset.pattern.permute.xlu0 1
  %490 = vperm.xlu0 %489, %v31
  %v491 = vpop.permute.xlu0 %490
  %492 = vset.pattern.permute.xlu0 1
  %493 = vperm.xlu0 %492, %v32
  %v494 = vpop.permute.xlu0 %493
  %495 = vset.pattern.permute.xlu0 1
  %496 = vperm.xlu0 %495, %v33
  %v497 = vpop.permute.xlu0 %496
  %498 = vset.pattern.permute.xlu0 1
  %499 = vperm.xlu0 %498, %v34
  %v500 = vpop.permute.xlu0 %499
  %501 = vset.pattern.permute.xlu0 1
  %502 = vperm.xlu0 %501, %v35
  %v503 = vpop.permute.xlu0 %502
  %504 = vset.pattern.permute.xlu0 1
  %505 = vperm.xlu0 %504, %v36
  %v506 = vpop.permute.xlu0 %505
  %507 = vset.pattern.permute.xlu0 1
  %508 = vperm.xlu0 %507, %v37
  %v509 = vpop.permute.xlu0 %508
  %510 = vset.pattern.permute.xlu0 1
  %511 = vperm.xlu0 %510, %v38
  %v512 = vpop.permute.xlu0 %511
  %513 = vset.pattern.permute.xlu0 1
  %514 = vperm.xlu0 %513, %v39
  %v515 = vpop.permute.xlu0 %514
  %516 = vset.pattern.permute.xlu0 1
  %517 = vperm.xlu0 %516, %v40
  %v518 = vpop.permute.xlu0 %517
  %519 = vset.pattern.permute.xlu0 1
  %520 = vperm.xlu0 %519, %v41
  %v521 = vpop.permute.xlu0 %520
  %522 = vset.pattern.permute.xlu0 1
  %523 = vperm.xlu0 %522, %v42
  %v524 = vpop.permute.xlu0 %523
  %525 = vset.pattern.permute.xlu0 1
  %526 = vperm.xlu0 %525, %v43
  %v527 = vpop.permute.xlu0 %526
  %528 = vset.pattern.permute.xlu0 1
  %529 = vperm.xlu0 %528, %v44
  %v530 = vpop.permute.xlu0 %529
  %531 = vset.pattern.permute.xlu0 1
  %532 = vperm.xlu0 %531, %v45
  %v533 = vpop.permute.xlu0 %532
  %534 = vset.pattern.permute.xlu0 1
  %535 = vperm.xlu0 %534, %v46
  %v536 = vpop.permute.xlu0 %535
  %537 = vset.pattern.permute.xlu0 1
  %538 = vperm.xlu0 %537, %v47
  %v539 = vpop.permute.xlu0 %538
  %540 = vset.pattern.permute.xlu0 1
  %541 = vperm.xlu0 %540, %v48
  %v542 = vpop.permute.xlu0 %541
  %543 = vset.pattern.permute.xlu0 1
  %544 = vperm.xlu0 %543, %v49
  %v545 = vpop.permute.xlu0 %544
  %546 = vset.pattern.permute.xlu0 1
  %547 = vperm.xlu0 %546, %v50
  %v548 = vpop.permute.xlu0 %547
  %549 = vset.pattern.permute.xlu0 1
  %550 = vperm.xlu0 %549, %v51
  %v551 = vpop.permute.xlu0 %550
  %552 = vset.pattern.permute.xlu0 1
  %553 = vperm.xlu0 %552, %v52
  %v554 = vpop.permute.xlu0 %553
  %555 = vset.pattern.permute.xlu0 1
  %556 = vperm.xlu0 %555, %v53
  %v557 = vpop.permute.xlu0 %556
  %558 = vset.pattern.permute.xlu0 1
  %559 = vperm.xlu0 %558, %v54
  %v560 = vpop.permute.xlu0 %559
  %561 = vset.pattern.permute.xlu0 1
  %562 = vperm.xlu0 %561, %v55
  %v563 = vpop.permute.xlu0 %562
  %564 = vset.pattern.permute.xlu0 1
  %565 = vperm.xlu0 %564, %v56
  %v566 = vpop.permute.xlu0 %565
  %567 = vset.pattern.permute.xlu0 1
  %568 = vperm.xlu0 %567, %v57
  %v569 = vpop.permute.xlu0 %568
  %570 = vset.pattern.permute.xlu0 1
  %571 = vperm.xlu0 %570, %v58
  %v572 = vpop.permute.xlu0 %571
  %573 = vset.pattern.permute.xlu0 1
  %574 = vperm.xlu0 %573, %v59
  %v575 = vpop.permute.xlu0 %574
  %576 = vset.pattern.permute.xlu0 1
  %577 = vperm.xlu0 %576, %v60
  %v578 = vpop.permute.xlu0 %577
  %579 = vset.pattern.permute.xlu0 1
  %580 = vperm.xlu0 %579, %v61
  %v581 = vpop.permute.xlu0 %580
  %582 = vset.pattern.permute.xlu0 1
  %583 = vperm.xlu0 %582, %v62
  %v584 = vpop.permute.xlu0 %583
  %585 = vset.pattern.permute.xlu0 1
  %586 = vperm.xlu0 %585, %v63
  %v587 = vpop.permute.xlu0 %586
  %588 = vset.pattern.permute.xlu0 1
  %589 = vperm.xlu0 %588, %v64
  %v590 = vpop.permute.xlu0 %589
  %591 = vset.pattern.permute.xlu0 1
  %592 = vperm.xlu0 %591, %v65
  %v593 = vpop.permute.xlu0 %592
  %594 = vset.pattern.permute.xlu0 1
  %595 = vperm.xlu0 %594, %v66
  %v596 = vpop.permute.xlu0 %595
  %597 = vset.pattern.permute.xlu0 1
  %598 = vperm.xlu0 %597, %v67
  %v599 = vpop.permute.xlu0 %598
  %600 = vset.pattern.permute.xlu0 1
  %601 = vperm.xlu0 %600, %v68
  %v602 = vpop.permute.xlu0 %601
  %603 = vset.pattern.permute.xlu0 1
  %604 = vperm.xlu0 %603, %v69
  %v605 = vpop.permute.xlu0 %604
  %606 = vset.pattern.permute.xlu0 1
  %607 = vperm.xlu0 %606, %v70
  %v608 = vpop.permute.xlu0 %607
  %609 = vset.pattern.permute.xlu0 1
  %610 = vperm.xlu0 %609, %v71
  %v611 = vpop.permute.xlu0 %610
  %612 = vset.pattern.permute.xlu0 1
  %613 = vperm.xlu0 %612, %v72
  %v614 = vpop.permute.xlu0 %613
  %615 = vset.pattern.permute.xlu0 1
  %616 = vperm.xlu0 %615, %v73
  %v617 = vpop.permute.xlu0 %616
  %618 = vset.pattern.permute.xlu0 1
  %619 = vperm.xlu0 %618, %v74
  %v620 = vpop.permute.xlu0 %619
  %621 = vset.pattern.permute.xlu0 1
  %622 = vperm.xlu0 %621, %v75
  %v623 = vpop.permute.xlu0 %622
  %624 = vset.pattern.permute.xlu0 1
  %625 = vperm.xlu0 %624, %v76
  %v626 = vpop.permute.xlu0 %625
  %627 = vset.pattern.permute.xlu0 1
  %628 = vperm.xlu0 %627, %v77
  %v629 = vpop.permute.xlu0 %628
  %630 = vset.pattern.permute.xlu0 1
  %631 = vperm.xlu0 %630, %v78
  %v632 = vpop.permute.xlu0 %631
  %633 = vset.pattern.permute.xlu0 1
  %634 = vperm.xlu0 %633, %v79
  %v635 = vpop.permute.xlu0 %634
  %636 = vset.pattern.permute.xlu0 1
  %637 = vperm.xlu0 %636, %v80
  %v638 = vpop.permute.xlu0 %637
  %639 = vset.pattern.permute.xlu0 1
  %640 = vperm.xlu0 %639, %v81
  %v641 = vpop.permute.xlu0 %640
  %642 = vset.pattern.permute.xlu0 1
  %643 = vperm.xlu0 %642, %v82
  %v644 = vpop.permute.xlu0 %643
  %645 = vset.pattern.permute.xlu0 1
  %646 = vperm.xlu0 %645, %v83
  %v647 = vpop.permute.xlu0 %646
  %648 = vset.pattern.permute.xlu0 1
  %649 = vperm.xlu0 %648, %v84
  %v650 = vpop.permute.xlu0 %649
  %651 = vset.pattern.permute.xlu0 1
  %652 = vperm.xlu0 %651, %v85
  %v653 = vpop.permute.xlu0 %652
  %654 = vset.pattern.permute.xlu0 1
  %655 = vperm.xlu0 %654, %v86
  %v656 = vpop.permute.xlu0 %655
  %657 = vset.pattern.permute.xlu0 1
  %658 = vperm.xlu0 %657, %v87
  %v659 = vpop.permute.xlu0 %658
  %660 = vset.pattern.permute.xlu0 1
  %661 = vperm.xlu0 %660, %v88
  %v662 = vpop.permute.xlu0 %661
  %663 = vset.pattern.permute.xlu0 1
  %664 = vperm.xlu0 %663, %v89
  %v665 = vpop.permute.xlu0 %664
  %666 = vset.pattern.permute.xlu0 1
  %667 = vperm.xlu0 %666, %v90
  %v668 = vpop.permute.xlu0 %667
  %vm669 = vcmp.eq.s32.totalorder %v92, %v479
  %vm670 = vcmp.eq.s32.totalorder %v92, %v482
  %vm671 = vcmp.eq.s32.totalorder %v92, %v485
  %vm672 = vcmp.eq.s32.totalorder %v92, %v488
  %vm673 = vcmp.eq.s32.totalorder %v92, %v491
  %vm674 = vcmp.eq.s32.totalorder %v92, %v494
  %vm675 = vcmp.eq.s32.totalorder %v92, %v497
  %vm676 = vcmp.eq.s32.totalorder %v92, %v500
  %vm677 = vcmp.eq.s32.totalorder %v92, %v503
  %vm678 = vcmp.eq.s32.totalorder %v92, %v506
  %vm679 = vcmp.eq.s32.totalorder %v92, %v509
  %vm680 = vcmp.eq.s32.totalorder %v92, %v512
  %vm681 = vcmp.eq.s32.totalorder %v92, %v515
  %vm682 = vcmp.eq.s32.totalorder %v92, %v518
  %vm683 = vcmp.eq.s32.totalorder %v92, %v521
  %vm684 = vcmp.eq.s32.totalorder %v92, %v524
  %vm685 = vcmp.eq.s32.totalorder %v92, %v527
  %vm686 = vcmp.eq.s32.totalorder %v92, %v530
  %vm687 = vcmp.eq.s32.totalorder %v92, %v533
  %vm688 = vcmp.eq.s32.totalorder %v92, %v536
  %vm689 = vcmp.eq.s32.totalorder %v92, %v539
  %vm690 = vcmp.eq.s32.totalorder %v92, %v542
  %vm691 = vcmp.eq.s32.totalorder %v92, %v545
  %vm692 = vcmp.eq.s32.totalorder %v92, %v548
  %vm693 = vcmp.eq.s32.totalorder %v92, %v551
  %vm694 = vcmp.eq.s32.totalorder %v92, %v554
  %vm695 = vcmp.eq.s32.totalorder %v92, %v557
  %vm696 = vcmp.eq.s32.totalorder %v92, %v560
  %vm697 = vcmp.eq.s32.totalorder %v92, %v563
  %vm698 = vcmp.eq.s32.totalorder %v92, %v566
  %vm699 = vcmp.eq.s32.totalorder %v92, %v569
  %vm700 = vcmp.eq.s32.totalorder %v92, %v572
  %vm701 = vcmp.eq.s32.totalorder %v92, %v575
  %vm702 = vcmp.eq.s32.totalorder %v92, %v578
  %vm703 = vcmp.eq.s32.totalorder %v92, %v581
  %vm704 = vcmp.eq.s32.totalorder %v92, %v584
  %vm705 = vcmp.eq.s32.totalorder %v92, %v587
  %vm706 = vcmp.eq.s32.totalorder %v92, %v590
  %vm707 = vcmp.eq.s32.totalorder %v92, %v593
  %vm708 = vcmp.eq.s32.totalorder %v92, %v596
  %vm709 = vcmp.eq.s32.totalorder %v92, %v599
  %vm710 = vcmp.eq.s32.totalorder %v92, %v602
  %vm711 = vcmp.eq.s32.totalorder %v92, %v605
  %vm712 = vcmp.eq.s32.totalorder %v92, %v608
  %vm713 = vcmp.eq.s32.totalorder %v92, %v611
  %vm714 = vcmp.eq.s32.totalorder %v92, %v614
  %vm715 = vcmp.eq.s32.totalorder %v92, %v617
  %vm716 = vcmp.eq.s32.totalorder %v92, %v620
  %vm717 = vcmp.eq.s32.totalorder %v92, %v623
  %vm718 = vcmp.eq.s32.totalorder %v92, %v626
  %vm719 = vcmp.eq.s32.totalorder %v92, %v629
  %vm720 = vcmp.eq.s32.totalorder %v92, %v632
  %vm721 = vcmp.eq.s32.totalorder %v92, %v635
  %vm722 = vcmp.eq.s32.totalorder %v92, %v638
  %vm723 = vcmp.eq.s32.totalorder %v92, %v641
  %vm724 = vcmp.eq.s32.totalorder %v92, %v644
  %vm725 = vcmp.eq.s32.totalorder %v92, %v647
  %vm726 = vcmp.eq.s32.totalorder %v92, %v650
  %vm727 = vcmp.eq.s32.totalorder %v92, %v653
  %vm728 = vcmp.eq.s32.totalorder %v92, %v656
  %vm729 = vcmp.eq.s32.totalorder %v92, %v659
  %vm730 = vcmp.eq.s32.totalorder %v92, %v662
  %vm731 = vcmp.eq.s32.totalorder %v92, %v665
  %vm732 = vcmp.eq.s32.totalorder %v92, %v668
  %v733 = vsel %vm669, 1.0, 0.0
  %v734 = vsel %vm670, 1.0, 0.0
  %v735 = vsel %vm671, 1.0, 0.0
  %v736 = vsel %vm672, 1.0, 0.0
  %v737 = vsel %vm673, 1.0, 0.0
  %v738 = vsel %vm674, 1.0, 0.0
  %v739 = vsel %vm675, 1.0, 0.0
  %v740 = vsel %vm676, 1.0, 0.0
  %v741 = vsel %vm677, 1.0, 0.0
  %v742 = vsel %vm678, 1.0, 0.0
  %v743 = vsel %vm679, 1.0, 0.0
  %v744 = vsel %vm680, 1.0, 0.0
  %v745 = vsel %vm681, 1.0, 0.0
  %v746 = vsel %vm682, 1.0, 0.0
  %v747 = vsel %vm683, 1.0, 0.0
  %v748 = vsel %vm684, 1.0, 0.0
  %v749 = vsel %vm685, 1.0, 0.0
  %v750 = vsel %vm686, 1.0, 0.0
  %v751 = vsel %vm687, 1.0, 0.0
  %v752 = vsel %vm688, 1.0, 0.0
  %v753 = vsel %vm689, 1.0, 0.0
  %v754 = vsel %vm690, 1.0, 0.0
  %v755 = vsel %vm691, 1.0, 0.0
  %v756 = vsel %vm692, 1.0, 0.0
  %v757 = vsel %vm693, 1.0, 0.0
  %v758 = vsel %vm694, 1.0, 0.0
  %v759 = vsel %vm695, 1.0, 0.0
  %v760 = vsel %vm696, 1.0, 0.0
  %v761 = vsel %vm697, 1.0, 0.0
  %v762 = vsel %vm698, 1.0, 0.0
  %v763 = vsel %vm699, 1.0, 0.0
  %v764 = vsel %vm700, 1.0, 0.0
  %v765 = vsel %vm701, 1.0, 0.0
  %v766 = vsel %vm702, 1.0, 0.0
  %v767 = vsel %vm703, 1.0, 0.0
  %v768 = vsel %vm704, 1.0, 0.0
  %v769 = vsel %vm705, 1.0, 0.0
  %v770 = vsel %vm706, 1.0, 0.0
  %v771 = vsel %vm707, 1.0, 0.0
  %v772 = vsel %vm708, 1.0, 0.0
  %v773 = vsel %vm709, 1.0, 0.0
  %v774 = vsel %vm710, 1.0, 0.0
  %v775 = vsel %vm711, 1.0, 0.0
  %v776 = vsel %vm712, 1.0, 0.0
  %v777 = vsel %vm713, 1.0, 0.0
  %v778 = vsel %vm714, 1.0, 0.0
  %v779 = vsel %vm715, 1.0, 0.0
  %v780 = vsel %vm716, 1.0, 0.0
  %v781 = vsel %vm717, 1.0, 0.0
  %v782 = vsel %vm718, 1.0, 0.0
  %v783 = vsel %vm719, 1.0, 0.0
  %v784 = vsel %vm720, 1.0, 0.0
  %v785 = vsel %vm721, 1.0, 0.0
  %v786 = vsel %vm722, 1.0, 0.0
  %v787 = vsel %vm723, 1.0, 0.0
  %v788 = vsel %vm724, 1.0, 0.0
  %v789 = vsel %vm725, 1.0, 0.0
  %v790 = vsel %vm726, 1.0, 0.0
  %v791 = vsel %vm727, 1.0, 0.0
  %v792 = vsel %vm728, 1.0, 0.0
  %v793 = vsel %vm729, 1.0, 0.0
  %v794 = vsel %vm730, 1.0, 0.0
  %v795 = vsel %vm731, 1.0, 0.0
  %v796 = vsel %vm732, 1.0, 0.0
  %v797 = vadd.f32 %v413, %v733
  %v798 = vadd.f32 %v414, %v734
  %v799 = vadd.f32 %v415, %v735
  %v800 = vadd.f32 %v416, %v736
  %v801 = vadd.f32 %v417, %v737
  %v802 = vadd.f32 %v418, %v738
  %v803 = vadd.f32 %v419, %v739
  %v804 = vadd.f32 %v420, %v740
  %v805 = vadd.f32 %v421, %v741
  %v806 = vadd.f32 %v422, %v742
  %v807 = vadd.f32 %v423, %v743
  %v808 = vadd.f32 %v424, %v744
  %v809 = vadd.f32 %v425, %v745
  %v810 = vadd.f32 %v426, %v746
  %v811 = vadd.f32 %v427, %v747
  %v812 = vadd.f32 %v428, %v748
  %v813 = vadd.f32 %v429, %v749
  %v814 = vadd.f32 %v430, %v750
  %v815 = vadd.f32 %v431, %v751
  %v816 = vadd.f32 %v432, %v752
  %v817 = vadd.f32 %v433, %v753
  %v818 = vadd.f32 %v434, %v754
  %v819 = vadd.f32 %v435, %v755
  %v820 = vadd.f32 %v436, %v756
  %v821 = vadd.f32 %v437, %v757
  %v822 = vadd.f32 %v438, %v758
  %v823 = vadd.f32 %v439, %v759
  %v824 = vadd.f32 %v440, %v760
  %v825 = vadd.f32 %v441, %v761
  %v826 = vadd.f32 %v442, %v762
  %v827 = vadd.f32 %v443, %v763
  %v828 = vadd.f32 %v444, %v764
  %v829 = vadd.f32 %v445, %v765
  %v830 = vadd.f32 %v446, %v766
  %v831 = vadd.f32 %v447, %v767
  %v832 = vadd.f32 %v448, %v768
  %v833 = vadd.f32 %v449, %v769
  %v834 = vadd.f32 %v450, %v770
  %v835 = vadd.f32 %v451, %v771
  %v836 = vadd.f32 %v452, %v772
  %v837 = vadd.f32 %v453, %v773
  %v838 = vadd.f32 %v454, %v774
  %v839 = vadd.f32 %v455, %v775
  %v840 = vadd.f32 %v456, %v776
  %v841 = vadd.f32 %v457, %v777
  %v842 = vadd.f32 %v458, %v778
  %v843 = vadd.f32 %v459, %v779
  %v844 = vadd.f32 %v460, %v780
  %v845 = vadd.f32 %v461, %v781
  %v846 = vadd.f32 %v462, %v782
  %v847 = vadd.f32 %v463, %v783
  %v848 = vadd.f32 %v464, %v784
  %v849 = vadd.f32 %v465, %v785
  %v850 = vadd.f32 %v466, %v786
  %v851 = vadd.f32 %v467, %v787
  %v852 = vadd.f32 %v468, %v788
  %v853 = vadd.f32 %v469, %v789
  %v854 = vadd.f32 %v470, %v790
  %v855 = vadd.f32 %v471, %v791
  %v856 = vadd.f32 %v472, %v792
  %v857 = vadd.f32 %v473, %v793
  %v858 = vadd.f32 %v474, %v794
  %v859 = vadd.f32 %v475, %v795
  %v860 = vadd.f32 %v476, %v796
  %861 = vset.pattern.permute.xlu0 2
  %862 = vperm.xlu0 %861, %v27
  %v863 = vpop.permute.xlu0 %862
  %864 = vset.pattern.permute.xlu0 2
  %865 = vperm.xlu0 %864, %v28
  %v866 = vpop.permute.xlu0 %865
  %867 = vset.pattern.permute.xlu0 2
  %868 = vperm.xlu0 %867, %v29
  %v869 = vpop.permute.xlu0 %868
  %870 = vset.pattern.permute.xlu0 2
  %871 = vperm.xlu0 %870, %v30
  %v872 = vpop.permute.xlu0 %871
  %873 = vset.pattern.permute.xlu0 2
  %874 = vperm.xlu0 %873, %v31
  %v875 = vpop.permute.xlu0 %874
  %876 = vset.pattern.permute.xlu0 2
  %877 = vperm.xlu0 %876, %v32
  %v878 = vpop.permute.xlu0 %877
  %879 = vset.pattern.permute.xlu0 2
  %880 = vperm.xlu0 %879, %v33
  %v881 = vpop.permute.xlu0 %880
  %882 = vset.pattern.permute.xlu0 2
  %883 = vperm.xlu0 %882, %v34
  %v884 = vpop.permute.xlu0 %883
  %885 = vset.pattern.permute.xlu0 2
  %886 = vperm.xlu0 %885, %v35
  %v887 = vpop.permute.xlu0 %886
  %888 = vset.pattern.permute.xlu0 2
  %889 = vperm.xlu0 %888, %v36
  %v890 = vpop.permute.xlu0 %889
  %891 = vset.pattern.permute.xlu0 2
  %892 = vperm.xlu0 %891, %v37
  %v893 = vpop.permute.xlu0 %892
  %894 = vset.pattern.permute.xlu0 2
  %895 = vperm.xlu0 %894, %v38
  %v896 = vpop.permute.xlu0 %895
  %897 = vset.pattern.permute.xlu0 2
  %898 = vperm.xlu0 %897, %v39
  %v899 = vpop.permute.xlu0 %898
  %900 = vset.pattern.permute.xlu0 2
  %901 = vperm.xlu0 %900, %v40
  %v902 = vpop.permute.xlu0 %901
  %903 = vset.pattern.permute.xlu0 2
  %904 = vperm.xlu0 %903, %v41
  %v905 = vpop.permute.xlu0 %904
  %906 = vset.pattern.permute.xlu0 2
  %907 = vperm.xlu0 %906, %v42
  %v908 = vpop.permute.xlu0 %907
  %909 = vset.pattern.permute.xlu0 2
  %910 = vperm.xlu0 %909, %v43
  %v911 = vpop.permute.xlu0 %910
  %912 = vset.pattern.permute.xlu0 2
  %913 = vperm.xlu0 %912, %v44
  %v914 = vpop.permute.xlu0 %913
  %915 = vset.pattern.permute.xlu0 2
  %916 = vperm.xlu0 %915, %v45
  %v917 = vpop.permute.xlu0 %916
  %918 = vset.pattern.permute.xlu0 2
  %919 = vperm.xlu0 %918, %v46
  %v920 = vpop.permute.xlu0 %919
  %921 = vset.pattern.permute.xlu0 2
  %922 = vperm.xlu0 %921, %v47
  %v923 = vpop.permute.xlu0 %922
  %924 = vset.pattern.permute.xlu0 2
  %925 = vperm.xlu0 %924, %v48
  %v926 = vpop.permute.xlu0 %925
  %927 = vset.pattern.permute.xlu0 2
  %928 = vperm.xlu0 %927, %v49
  %v929 = vpop.permute.xlu0 %928
  %930 = vset.pattern.permute.xlu0 2
  %931 = vperm.xlu0 %930, %v50
  %v932 = vpop.permute.xlu0 %931
  %933 = vset.pattern.permute.xlu0 2
  %934 = vperm.xlu0 %933, %v51
  %v935 = vpop.permute.xlu0 %934
  %936 = vset.pattern.permute.xlu0 2
  %937 = vperm.xlu0 %936, %v52
  %v938 = vpop.permute.xlu0 %937
  %939 = vset.pattern.permute.xlu0 2
  %940 = vperm.xlu0 %939, %v53
  %v941 = vpop.permute.xlu0 %940
  %942 = vset.pattern.permute.xlu0 2
  %943 = vperm.xlu0 %942, %v54
  %v944 = vpop.permute.xlu0 %943
  %945 = vset.pattern.permute.xlu0 2
  %946 = vperm.xlu0 %945, %v55
  %v947 = vpop.permute.xlu0 %946
  %948 = vset.pattern.permute.xlu0 2
  %949 = vperm.xlu0 %948, %v56
  %v950 = vpop.permute.xlu0 %949
  %951 = vset.pattern.permute.xlu0 2
  %952 = vperm.xlu0 %951, %v57
  %v953 = vpop.permute.xlu0 %952
  %954 = vset.pattern.permute.xlu0 2
  %955 = vperm.xlu0 %954, %v58
  %v956 = vpop.permute.xlu0 %955
  %957 = vset.pattern.permute.xlu0 2
  %958 = vperm.xlu0 %957, %v59
  %v959 = vpop.permute.xlu0 %958
  %960 = vset.pattern.permute.xlu0 2
  %961 = vperm.xlu0 %960, %v60
  %v962 = vpop.permute.xlu0 %961
  %963 = vset.pattern.permute.xlu0 2
  %964 = vperm.xlu0 %963, %v61
  %v965 = vpop.permute.xlu0 %964
  %966 = vset.pattern.permute.xlu0 2
  %967 = vperm.xlu0 %966, %v62
  %v968 = vpop.permute.xlu0 %967
  %969 = vset.pattern.permute.xlu0 2
  %970 = vperm.xlu0 %969, %v63
  %v971 = vpop.permute.xlu0 %970
  %972 = vset.pattern.permute.xlu0 2
  %973 = vperm.xlu0 %972, %v64
  %v974 = vpop.permute.xlu0 %973
  %975 = vset.pattern.permute.xlu0 2
  %976 = vperm.xlu0 %975, %v65
  %v977 = vpop.permute.xlu0 %976
  %978 = vset.pattern.permute.xlu0 2
  %979 = vperm.xlu0 %978, %v66
  %v980 = vpop.permute.xlu0 %979
  %981 = vset.pattern.permute.xlu0 2
  %982 = vperm.xlu0 %981, %v67
  %v983 = vpop.permute.xlu0 %982
  %984 = vset.pattern.permute.xlu0 2
  %985 = vperm.xlu0 %984, %v68
  %v986 = vpop.permute.xlu0 %985
  %987 = vset.pattern.permute.xlu0 2
  %988 = vperm.xlu0 %987, %v69
  %v989 = vpop.permute.xlu0 %988
  %990 = vset.pattern.permute.xlu0 2
  %991 = vperm.xlu0 %990, %v70
  %v992 = vpop.permute.xlu0 %991
  %993 = vset.pattern.permute.xlu0 2
  %994 = vperm.xlu0 %993, %v71
  %v995 = vpop.permute.xlu0 %994
  %996 = vset.pattern.permute.xlu0 2
  %997 = vperm.xlu0 %996, %v72
  %v998 = vpop.permute.xlu0 %997
  %999 = vset.pattern.permute.xlu0 2
  %1000 = vperm.xlu0 %999, %v73
  %v1001 = vpop.permute.xlu0 %1000
  %1002 = vset.pattern.permute.xlu0 2
  %1003 = vperm.xlu0 %1002, %v74
  %v1004 = vpop.permute.xlu0 %1003
  %1005 = vset.pattern.permute.xlu0 2
  %1006 = vperm.xlu0 %1005, %v75
  %v1007 = vpop.permute.xlu0 %1006
  %1008 = vset.pattern.permute.xlu0 2
  %1009 = vperm.xlu0 %1008, %v76
  %v1010 = vpop.permute.xlu0 %1009
  %1011 = vset.pattern.permute.xlu0 2
  %1012 = vperm.xlu0 %1011, %v77
  %v1013 = vpop.permute.xlu0 %1012
  %1014 = vset.pattern.permute.xlu0 2
  %1015 = vperm.xlu0 %1014, %v78
  %v1016 = vpop.permute.xlu0 %1015
  %1017 = vset.pattern.permute.xlu0 2
  %1018 = vperm.xlu0 %1017, %v79
  %v1019 = vpop.permute.xlu0 %1018
  %1020 = vset.pattern.permute.xlu0 2
  %1021 = vperm.xlu0 %1020, %v80
  %v1022 = vpop.permute.xlu0 %1021
  %1023 = vset.pattern.permute.xlu0 2
  %1024 = vperm.xlu0 %1023, %v81
  %v1025 = vpop.permute.xlu0 %1024
  %1026 = vset.pattern.permute.xlu0 2
  %1027 = vperm.xlu0 %1026, %v82
  %v1028 = vpop.permute.xlu0 %1027
  %1029 = vset.pattern.permute.xlu0 2
  %1030 = vperm.xlu0 %1029, %v83
  %v1031 = vpop.permute.xlu0 %1030
  %1032 = vset.pattern.permute.xlu0 2
  %1033 = vperm.xlu0 %1032, %v84
  %v1034 = vpop.permute.xlu0 %1033
  %1035 = vset.pattern.permute.xlu0 2
  %1036 = vperm.xlu0 %1035, %v85
  %v1037 = vpop.permute.xlu0 %1036
  %1038 = vset.pattern.permute.xlu0 2
  %1039 = vperm.xlu0 %1038, %v86
  %v1040 = vpop.permute.xlu0 %1039
  %1041 = vset.pattern.permute.xlu0 2
  %1042 = vperm.xlu0 %1041, %v87
  %v1043 = vpop.permute.xlu0 %1042
  %1044 = vset.pattern.permute.xlu0 2
  %1045 = vperm.xlu0 %1044, %v88
  %v1046 = vpop.permute.xlu0 %1045
  %1047 = vset.pattern.permute.xlu0 2
  %1048 = vperm.xlu0 %1047, %v89
  %v1049 = vpop.permute.xlu0 %1048
  %1050 = vset.pattern.permute.xlu0 2
  %1051 = vperm.xlu0 %1050, %v90
  %v1052 = vpop.permute.xlu0 %1051
  %vm1053 = vcmp.eq.s32.totalorder %v92, %v863
  %vm1054 = vcmp.eq.s32.totalorder %v92, %v866
  %vm1055 = vcmp.eq.s32.totalorder %v92, %v869
  %vm1056 = vcmp.eq.s32.totalorder %v92, %v872
  %vm1057 = vcmp.eq.s32.totalorder %v92, %v875
  %vm1058 = vcmp.eq.s32.totalorder %v92, %v878
  %vm1059 = vcmp.eq.s32.totalorder %v92, %v881
  %vm1060 = vcmp.eq.s32.totalorder %v92, %v884
  %vm1061 = vcmp.eq.s32.totalorder %v92, %v887
  %vm1062 = vcmp.eq.s32.totalorder %v92, %v890
  %vm1063 = vcmp.eq.s32.totalorder %v92, %v893
  %vm1064 = vcmp.eq.s32.totalorder %v92, %v896
  %vm1065 = vcmp.eq.s32.totalorder %v92, %v899
  %vm1066 = vcmp.eq.s32.totalorder %v92, %v902
  %vm1067 = vcmp.eq.s32.totalorder %v92, %v905
  %vm1068 = vcmp.eq.s32.totalorder %v92, %v908
  %vm1069 = vcmp.eq.s32.totalorder %v92, %v911
  %vm1070 = vcmp.eq.s32.totalorder %v92, %v914
  %vm1071 = vcmp.eq.s32.totalorder %v92, %v917
  %vm1072 = vcmp.eq.s32.totalorder %v92, %v920
  %vm1073 = vcmp.eq.s32.totalorder %v92, %v923
  %vm1074 = vcmp.eq.s32.totalorder %v92, %v926
  %vm1075 = vcmp.eq.s32.totalorder %v92, %v929
  %vm1076 = vcmp.eq.s32.totalorder %v92, %v932
  %vm1077 = vcmp.eq.s32.totalorder %v92, %v935
  %vm1078 = vcmp.eq.s32.totalorder %v92, %v938
  %vm1079 = vcmp.eq.s32.totalorder %v92, %v941
  %vm1080 = vcmp.eq.s32.totalorder %v92, %v944
  %vm1081 = vcmp.eq.s32.totalorder %v92, %v947
  %vm1082 = vcmp.eq.s32.totalorder %v92, %v950
  %vm1083 = vcmp.eq.s32.totalorder %v92, %v953
  %vm1084 = vcmp.eq.s32.totalorder %v92, %v956
  %vm1085 = vcmp.eq.s32.totalorder %v92, %v959
  %vm1086 = vcmp.eq.s32.totalorder %v92, %v962
  %vm1087 = vcmp.eq.s32.totalorder %v92, %v965
  %vm1088 = vcmp.eq.s32.totalorder %v92, %v968
  %vm1089 = vcmp.eq.s32.totalorder %v92, %v971
  %vm1090 = vcmp.eq.s32.totalorder %v92, %v974
  %vm1091 = vcmp.eq.s32.totalorder %v92, %v977
  %vm1092 = vcmp.eq.s32.totalorder %v92, %v980
  %vm1093 = vcmp.eq.s32.totalorder %v92, %v983
  %vm1094 = vcmp.eq.s32.totalorder %v92, %v986
  %vm1095 = vcmp.eq.s32.totalorder %v92, %v989
  %vm1096 = vcmp.eq.s32.totalorder %v92, %v992
  %vm1097 = vcmp.eq.s32.totalorder %v92, %v995
  %vm1098 = vcmp.eq.s32.totalorder %v92, %v998
  %vm1099 = vcmp.eq.s32.totalorder %v92, %v1001
  %vm1100 = vcmp.eq.s32.totalorder %v92, %v1004
  %vm1101 = vcmp.eq.s32.totalorder %v92, %v1007
  %vm1102 = vcmp.eq.s32.totalorder %v92, %v1010
  %vm1103 = vcmp.eq.s32.totalorder %v92, %v1013
  %vm1104 = vcmp.eq.s32.totalorder %v92, %v1016
  %vm1105 = vcmp.eq.s32.totalorder %v92, %v1019
  %vm1106 = vcmp.eq.s32.totalorder %v92, %v1022
  %vm1107 = vcmp.eq.s32.totalorder %v92, %v1025
  %vm1108 = vcmp.eq.s32.totalorder %v92, %v1028
  %vm1109 = vcmp.eq.s32.totalorder %v92, %v1031
  %vm1110 = vcmp.eq.s32.totalorder %v92, %v1034
  %vm1111 = vcmp.eq.s32.totalorder %v92, %v1037
  %vm1112 = vcmp.eq.s32.totalorder %v92, %v1040
  %vm1113 = vcmp.eq.s32.totalorder %v92, %v1043
  %vm1114 = vcmp.eq.s32.totalorder %v92, %v1046
  %vm1115 = vcmp.eq.s32.totalorder %v92, %v1049
  %vm1116 = vcmp.eq.s32.totalorder %v92, %v1052
  %v1117 = vsel %vm1053, 1.0, 0.0
  %v1118 = vsel %vm1054, 1.0, 0.0
  %v1119 = vsel %vm1055, 1.0, 0.0
  %v1120 = vsel %vm1056, 1.0, 0.0
  %v1121 = vsel %vm1057, 1.0, 0.0
  %v1122 = vsel %vm1058, 1.0, 0.0
  %v1123 = vsel %vm1059, 1.0, 0.0
  %v1124 = vsel %vm1060, 1.0, 0.0
  %v1125 = vsel %vm1061, 1.0, 0.0
  %v1126 = vsel %vm1062, 1.0, 0.0
  %v1127 = vsel %vm1063, 1.0, 0.0
  %v1128 = vsel %vm1064, 1.0, 0.0
  %v1129 = vsel %vm1065, 1.0, 0.0
  %v1130 = vsel %vm1066, 1.0, 0.0
  %v1131 = vsel %vm1067, 1.0, 0.0
  %v1132 = vsel %vm1068, 1.0, 0.0
  %v1133 = vsel %vm1069, 1.0, 0.0
  %v1134 = vsel %vm1070, 1.0, 0.0
  %v1135 = vsel %vm1071, 1.0, 0.0
  %v1136 = vsel %vm1072, 1.0, 0.0
  %v1137 = vsel %vm1073, 1.0, 0.0
  %v1138 = vsel %vm1074, 1.0, 0.0
  %v1139 = vsel %vm1075, 1.0, 0.0
  %v1140 = vsel %vm1076, 1.0, 0.0
  %v1141 = vsel %vm1077, 1.0, 0.0
  %v1142 = vsel %vm1078, 1.0, 0.0
  %v1143 = vsel %vm1079, 1.0, 0.0
  %v1144 = vsel %vm1080, 1.0, 0.0
  %v1145 = vsel %vm1081, 1.0, 0.0
  %v1146 = vsel %vm1082, 1.0, 0.0
  %v1147 = vsel %vm1083, 1.0, 0.0
  %v1148 = vsel %vm1084, 1.0, 0.0
  %v1149 = vsel %vm1085, 1.0, 0.0
  %v1150 = vsel %vm1086, 1.0, 0.0
  %v1151 = vsel %vm1087, 1.0, 0.0
  %v1152 = vsel %vm1088, 1.0, 0.0
  %v1153 = vsel %vm1089, 1.0, 0.0
  %v1154 = vsel %vm1090, 1.0, 0.0
  %v1155 = vsel %vm1091, 1.0, 0.0
  %v1156 = vsel %vm1092, 1.0, 0.0
  %v1157 = vsel %vm1093, 1.0, 0.0
  %v1158 = vsel %vm1094, 1.0, 0.0
  %v1159 = vsel %vm1095, 1.0, 0.0
  %v1160 = vsel %vm1096, 1.0, 0.0
  %v1161 = vsel %vm1097, 1.0, 0.0
  %v1162 = vsel %vm1098, 1.0, 0.0
  %v1163 = vsel %vm1099, 1.0, 0.0
  %v1164 = vsel %vm1100, 1.0, 0.0
  %v1165 = vsel %vm1101, 1.0, 0.0
  %v1166 = vsel %vm1102, 1.0, 0.0
  %v1167 = vsel %vm1103, 1.0, 0.0
  %v1168 = vsel %vm1104, 1.0, 0.0
  %v1169 = vsel %vm1105, 1.0, 0.0
  %v1170 = vsel %vm1106, 1.0, 0.0
  %v1171 = vsel %vm1107, 1.0, 0.0
  %v1172 = vsel %vm1108, 1.0, 0.0
  %v1173 = vsel %vm1109, 1.0, 0.0
  %v1174 = vsel %vm1110, 1.0, 0.0
  %v1175 = vsel %vm1111, 1.0, 0.0
  %v1176 = vsel %vm1112, 1.0, 0.0
  %v1177 = vsel %vm1113, 1.0, 0.0
  %v1178 = vsel %vm1114, 1.0, 0.0
  %v1179 = vsel %vm1115, 1.0, 0.0
  %v1180 = vsel %vm1116, 1.0, 0.0
  %v1181 = vadd.f32 %v797, %v1117
  %v1182 = vadd.f32 %v798, %v1118
  %v1183 = vadd.f32 %v799, %v1119
  %v1184 = vadd.f32 %v800, %v1120
  %v1185 = vadd.f32 %v801, %v1121
  %v1186 = vadd.f32 %v802, %v1122
  %v1187 = vadd.f32 %v803, %v1123
  %v1188 = vadd.f32 %v804, %v1124
  %v1189 = vadd.f32 %v805, %v1125
  %v1190 = vadd.f32 %v806, %v1126
  %v1191 = vadd.f32 %v807, %v1127
  %v1192 = vadd.f32 %v808, %v1128
  %v1193 = vadd.f32 %v809, %v1129
  %v1194 = vadd.f32 %v810, %v1130
  %v1195 = vadd.f32 %v811, %v1131
  %v1196 = vadd.f32 %v812, %v1132
  %v1197 = vadd.f32 %v813, %v1133
  %v1198 = vadd.f32 %v814, %v1134
  %v1199 = vadd.f32 %v815, %v1135
  %v1200 = vadd.f32 %v816, %v1136
  %v1201 = vadd.f32 %v817, %v1137
  %v1202 = vadd.f32 %v818, %v1138
  %v1203 = vadd.f32 %v819, %v1139
  %v1204 = vadd.f32 %v820, %v1140
  %v1205 = vadd.f32 %v821, %v1141
  %v1206 = vadd.f32 %v822, %v1142
  %v1207 = vadd.f32 %v823, %v1143
  %v1208 = vadd.f32 %v824, %v1144
  %v1209 = vadd.f32 %v825, %v1145
  %v1210 = vadd.f32 %v826, %v1146
  %v1211 = vadd.f32 %v827, %v1147
  %v1212 = vadd.f32 %v828, %v1148
  %v1213 = vadd.f32 %v829, %v1149
  %v1214 = vadd.f32 %v830, %v1150
  %v1215 = vadd.f32 %v831, %v1151
  %v1216 = vadd.f32 %v832, %v1152
  %v1217 = vadd.f32 %v833, %v1153
  %v1218 = vadd.f32 %v834, %v1154
  %v1219 = vadd.f32 %v835, %v1155
  %v1220 = vadd.f32 %v836, %v1156
  %v1221 = vadd.f32 %v837, %v1157
  %v1222 = vadd.f32 %v838, %v1158
  %v1223 = vadd.f32 %v839, %v1159
  %v1224 = vadd.f32 %v840, %v1160
  %v1225 = vadd.f32 %v841, %v1161
  %v1226 = vadd.f32 %v842, %v1162
  %v1227 = vadd.f32 %v843, %v1163
  %v1228 = vadd.f32 %v844, %v1164
  %v1229 = vadd.f32 %v845, %v1165
  %v1230 = vadd.f32 %v846, %v1166
  %v1231 = vadd.f32 %v847, %v1167
  %v1232 = vadd.f32 %v848, %v1168
  %v1233 = vadd.f32 %v849, %v1169
  %v1234 = vadd.f32 %v850, %v1170
  %v1235 = vadd.f32 %v851, %v1171
  %v1236 = vadd.f32 %v852, %v1172
  %v1237 = vadd.f32 %v853, %v1173
  %v1238 = vadd.f32 %v854, %v1174
  %v1239 = vadd.f32 %v855, %v1175
  %v1240 = vadd.f32 %v856, %v1176
  %v1241 = vadd.f32 %v857, %v1177
  %v1242 = vadd.f32 %v858, %v1178
  %v1243 = vadd.f32 %v859, %v1179
  %v1244 = vadd.f32 %v860, %v1180
  %v1245 = vpack.c.bf16 %v1182, %v1181
  %v1246 = vpack.c.bf16 %v1184, %v1183
  %v1247 = vpack.c.bf16 %v1186, %v1185
  %v1248 = vpack.c.bf16 %v1188, %v1187
  %v1249 = vpack.c.bf16 %v1190, %v1189
  %v1250 = vpack.c.bf16 %v1192, %v1191
  %v1251 = vpack.c.bf16 %v1194, %v1193
  %v1252 = vpack.c.bf16 %v1196, %v1195
  %v1253 = vpack.c.bf16 %v1198, %v1197
  %v1254 = vpack.c.bf16 %v1200, %v1199
  %v1255 = vpack.c.bf16 %v1202, %v1201
  %v1256 = vpack.c.bf16 %v1204, %v1203
  %v1257 = vpack.c.bf16 %v1206, %v1205
  %v1258 = vpack.c.bf16 %v1208, %v1207
  %v1259 = vpack.c.bf16 %v1210, %v1209
  %v1260 = vpack.c.bf16 %v1212, %v1211
  %v1261 = vpack.c.bf16 %v1214, %v1213
  %v1262 = vpack.c.bf16 %v1216, %v1215
  %v1263 = vpack.c.bf16 %v1218, %v1217
  %v1264 = vpack.c.bf16 %v1220, %v1219
  %v1265 = vpack.c.bf16 %v1222, %v1221
  %v1266 = vpack.c.bf16 %v1224, %v1223
  %v1267 = vpack.c.bf16 %v1226, %v1225
  %v1268 = vpack.c.bf16 %v1228, %v1227
  %v1269 = vpack.c.bf16 %v1230, %v1229
  %v1270 = vpack.c.bf16 %v1232, %v1231
  %v1271 = vpack.c.bf16 %v1234, %v1233
  %v1272 = vpack.c.bf16 %v1236, %v1235
  %v1273 = vpack.c.bf16 %v1238, %v1237
  %v1274 = vpack.c.bf16 %v1240, %v1239
  %v1275 = vpack.c.bf16 %v1242, %v1241
  %v1276 = vpack.c.bf16 %v1244, %v1243
  %v1277 = vld [vmem:[%s1] sm:$0xf]
  %v1278 = vld [vmem:[%s1 + $0x4] sm:$0xf]
  %v1279 = vld [vmem:[%s1 + $0x8] sm:$0xf]
  %v1280 = vld [vmem:[%s1 + $0xc] sm:$0xf]
  %v1281 = vld [vmem:[%s1 + $0x10] sm:$0x3]
  %v1282 = vld [vmem:[%s2] sm:$0x1]
  %v1284 = vlaneseq
  %v1285 = vshrl.u32 %v1284, 7
  %v1286 = vsub.s32 0, %v1285
  %v1287 = vrot.slane %v1282, %v1286
  %v1294 = vunpack.c.l.b16 %v1277
  %v1295 = vunpack.c.l.b16 %v1278
  %v1296 = vunpack.c.l.b16 %v1279
  %v1297 = vunpack.c.l.b16 %v1280
  %v1298 = vunpack.c.l.b16 %v1281
  %v1299 = vpack.c.b16 %v1295, %v1294
  %v1300 = vpack.c.b16 %v1297, %v1296
  %v1301 = vpack.c.b16 %v1298, %v1298
  %vm1304 = vcmask 293888
  %v1306 = vsel %vm1304, %v1245, 0
  %v1309 = vsel %vm1304, %v1246, 0
  %v1312 = vsel %vm1304, %v1247, 0
  %v1315 = vsel %vm1304, %v1248, 0
  %v1318 = vsel %vm1304, %v1249, 0
  %v1321 = vsel %vm1304, %v1250, 0
  %v1324 = vsel %vm1304, %v1251, 0
  %v1327 = vsel %vm1304, %v1252, 0
  %v1330 = vsel %vm1304, %v1253, 0
  %v1333 = vsel %vm1304, %v1254, 0
  %v1336 = vsel %vm1304, %v1255, 0
  %v1339 = vsel %vm1304, %v1256, 0
  %v1342 = vsel %vm1304, %v1257, 0
  %v1345 = vsel %vm1304, %v1258, 0
  %v1348 = vsel %vm1304, %v1259, 0
  %v1351 = vsel %vm1304, %v1260, 0
  %v1354 = vsel %vm1304, %v1261, 0
  %v1357 = vsel %vm1304, %v1262, 0
  %v1360 = vsel %vm1304, %v1263, 0
  %v1363 = vsel %vm1304, %v1264, 0
  %v1366 = vsel %vm1304, %v1265, 0
  %v1369 = vsel %vm1304, %v1266, 0
  %v1372 = vsel %vm1304, %v1267, 0
  %v1375 = vsel %vm1304, %v1268, 0
  %v1378 = vsel %vm1304, %v1269, 0
  %v1381 = vsel %vm1304, %v1270, 0
  %v1384 = vsel %vm1304, %v1271, 0
  %v1387 = vsel %vm1304, %v1272, 0
  %v1390 = vsel %vm1304, %v1273, 0
  %v1393 = vsel %vm1304, %v1274, 0
  %v1396 = vsel %vm1304, %v1275, 0
  %v1399 = vsel %vm1304, %v1276, 0
  %vm1401 = vcmask 1041408
  %v1403 = vsel %vm1401, %v1301, 0
  %1405 = vmatprep.subr.bf16.mxu0 0
  %1406 = vmatpush1.bf16.msra.mxu0 %v1299
  %1407 = vmatprep.subr.bf16.mxu0 0
  %1408 = vmatpush1.bf16.msra.mxu0 %v1300
  %1409 = vmatprep.subr.bf16.mxu0 0
  %1410 = vmatpush1.bf16.msra.mxu0 %v1403
  %1411 = vmatprep.subr.bf16.mxu0 0
  %1412 = vmatpush1.bf16.msra.mxu0 0
  %1413 = vmatprep.subr.bf16.mxu0 0
  %1414 = vmatpush1.bf16.msra.mxu0 0
  %1415 = vmatprep.subr.bf16.mxu0 0
  %1416 = vmatpush1.bf16.msra.mxu0 0
  %1417 = vmatprep.subr.bf16.mxu0 0
  %1418 = vmatpush1.bf16.msra.mxu0 0
  %1419 = vmatprep.subr.bf16.mxu0 0
  %1420 = vmatpush1.bf16.msra.mxu0 0
  %1421 = vmatprep.subr.bf16.mxu0 0
  %1422 = vmatpush1.bf16.msra.mxu0 0
  %1423 = vmatprep.subr.bf16.mxu0 0
  %1424 = vmatpush1.bf16.msra.mxu0 0
  %1425 = vmatprep.subr.bf16.mxu0 0
  %1426 = vmatpush1.bf16.msra.mxu0 0
  %1427 = vmatprep.subr.bf16.mxu0 0
  %1428 = vmatpush1.bf16.msra.mxu0 0
  %1429 = vmatprep.subr.bf16.mxu0 0
  %1430 = vmatpush1.bf16.msra.mxu0 0
  %1431 = vmatprep.subr.bf16.mxu0 0
  %1432 = vmatpush1.bf16.msra.mxu0 0
  %1433 = vmatprep.subr.bf16.mxu0 0
  %1434 = vmatpush1.bf16.msra.mxu0 0
  %1435 = vmatprep.subr.bf16.mxu0 0
  %1436 = vmatpush1.bf16.msra.mxu0 0
  %1437 = vmatprep.mubr.bf16.mxu0 0
  %1438 = vmatmul.mubr.bf16.gmra.mrb[0].mxu0 %v1306
  %v1439 = vpop.f32.mrb[0].mxu0
  %v1440 = vadd.f32 %v1287, %v1439
  %v1441 = vpop.f32.mrb[0].mxu0
  %v1442 = vpop.f32.mrb[0].mxu0
  %v1443 = vadd.f32 %v1287, %v1442
  %v1444 = vpop.f32.mrb[0].mxu0
  %1445 = vmatprep.mubr.bf16.mxu0 0
  %1446 = vmatmul.mubr.bf16.gmra.mrb[0].mxu0 %v1309
  %v1447 = vpop.f32.mrb[0].mxu0
  %v1448 = vadd.f32 %v1287, %v1447
  %v1449 = vpop.f32.mrb[0].mxu0
  %v1450 = vpop.f32.mrb[0].mxu0
  %v1451 = vadd.f32 %v1287, %v1450
  %v1452 = vpop.f32.mrb[0].mxu0
  %1453 = vmatprep.mubr.bf16.mxu0 0
  %1454 = vmatmul.mubr.bf16.gmra.mrb[0].mxu0 %v1312
  %v1455 = vpop.f32.mrb[0].mxu0
  %v1456 = vadd.f32 %v1287, %v1455
  %v1457 = vpop.f32.mrb[0].mxu0
  %v1458 = vpop.f32.mrb[0].mxu0
  %v1459 = vadd.f32 %v1287, %v1458
  %v1460 = vpop.f32.mrb[0].mxu0
  %1461 = vmatprep.mubr.bf16.mxu0 0
  %1462 = vmatmul.mubr.bf16.gmra.mrb[0].mxu0 %v1315
  %v1463 = vpop.f32.mrb[0].mxu0
  %v1464 = vadd.f32 %v1287, %v1463
  %v1465 = vpop.f32.mrb[0].mxu0
  %v1466 = vpop.f32.mrb[0].mxu0
  %v1467 = vadd.f32 %v1287, %v1466
  %v1468 = vpop.f32.mrb[0].mxu0
  %1469 = vmatprep.mubr.bf16.mxu0 0
  %1470 = vmatmul.mubr.bf16.gmra.mrb[0].mxu0 %v1318
  %v1471 = vpop.f32.mrb[0].mxu0
  %v1472 = vadd.f32 %v1287, %v1471
  %v1473 = vpop.f32.mrb[0].mxu0
  %v1474 = vpop.f32.mrb[0].mxu0
  %v1475 = vadd.f32 %v1287, %v1474
  %v1476 = vpop.f32.mrb[0].mxu0
  %1477 = vmatprep.mubr.bf16.mxu0 0
  %1478 = vmatmul.mubr.bf16.gmra.mrb[0].mxu0 %v1321
  %v1479 = vpop.f32.mrb[0].mxu0
  %v1480 = vadd.f32 %v1287, %v1479
  %v1481 = vpop.f32.mrb[0].mxu0
  %v1482 = vpop.f32.mrb[0].mxu0
  %v1483 = vadd.f32 %v1287, %v1482
  %v1484 = vpop.f32.mrb[0].mxu0
  %1485 = vmatprep.mubr.bf16.mxu0 0
  %1486 = vmatmul.mubr.bf16.gmra.mrb[0].mxu0 %v1324
  %v1487 = vpop.f32.mrb[0].mxu0
  %v1488 = vadd.f32 %v1287, %v1487
  %v1489 = vpop.f32.mrb[0].mxu0
  %v1490 = vpop.f32.mrb[0].mxu0
  %v1491 = vadd.f32 %v1287, %v1490
  %v1492 = vpop.f32.mrb[0].mxu0
  %1493 = vmatprep.mubr.bf16.mxu0 0
  %1494 = vmatmul.mubr.bf16.gmra.mrb[0].mxu0 %v1327
  %v1495 = vpop.f32.mrb[0].mxu0
  %v1496 = vadd.f32 %v1287, %v1495
  %v1497 = vpop.f32.mrb[0].mxu0
  %v1498 = vpop.f32.mrb[0].mxu0
  %v1499 = vadd.f32 %v1287, %v1498
  %v1500 = vpop.f32.mrb[0].mxu0
  %1501 = vmatprep.mubr.bf16.mxu0 0
  %1502 = vmatmul.mubr.bf16.gmra.mrb[0].mxu0 %v1330
  %v1503 = vpop.f32.mrb[0].mxu0
  %v1504 = vadd.f32 %v1287, %v1503
  %v1505 = vpop.f32.mrb[0].mxu0
  %v1506 = vpop.f32.mrb[0].mxu0
  %v1507 = vadd.f32 %v1287, %v1506
  %v1508 = vpop.f32.mrb[0].mxu0
  %1509 = vmatprep.mubr.bf16.mxu0 0
  %1510 = vmatmul.mubr.bf16.gmra.mrb[0].mxu0 %v1333
  %v1511 = vpop.f32.mrb[0].mxu0
  %v1512 = vadd.f32 %v1287, %v1511
  %v1513 = vpop.f32.mrb[0].mxu0
  %v1514 = vpop.f32.mrb[0].mxu0
  %v1515 = vadd.f32 %v1287, %v1514
  %v1516 = vpop.f32.mrb[0].mxu0
  %1517 = vmatprep.mubr.bf16.mxu0 0
  %1518 = vmatmul.mubr.bf16.gmra.mrb[0].mxu0 %v1336
  %v1519 = vpop.f32.mrb[0].mxu0
  %v1520 = vadd.f32 %v1287, %v1519
  %v1521 = vpop.f32.mrb[0].mxu0
  %v1522 = vpop.f32.mrb[0].mxu0
  %v1523 = vadd.f32 %v1287, %v1522
  %v1524 = vpop.f32.mrb[0].mxu0
  %1525 = vmatprep.mubr.bf16.mxu0 0
  %1526 = vmatmul.mubr.bf16.gmra.mrb[0].mxu0 %v1339
  %v1527 = vpop.f32.mrb[0].mxu0
  %v1528 = vadd.f32 %v1287, %v1527
  %v1529 = vpop.f32.mrb[0].mxu0
  %v1530 = vpop.f32.mrb[0].mxu0
  %v1531 = vadd.f32 %v1287, %v1530
  %v1532 = vpop.f32.mrb[0].mxu0
  %1533 = vmatprep.mubr.bf16.mxu0 0
  %1534 = vmatmul.mubr.bf16.gmra.mrb[0].mxu0 %v1342
  %v1535 = vpop.f32.mrb[0].mxu0
  %v1536 = vadd.f32 %v1287, %v1535
  %v1537 = vpop.f32.mrb[0].mxu0
  %v1538 = vpop.f32.mrb[0].mxu0
  %v1539 = vadd.f32 %v1287, %v1538
  %v1540 = vpop.f32.mrb[0].mxu0
  %1541 = vmatprep.mubr.bf16.mxu0 0
  %1542 = vmatmul.mubr.bf16.gmra.mrb[0].mxu0 %v1345
  %v1543 = vpop.f32.mrb[0].mxu0
  %v1544 = vadd.f32 %v1287, %v1543
  %v1545 = vpop.f32.mrb[0].mxu0
  %v1546 = vpop.f32.mrb[0].mxu0
  %v1547 = vadd.f32 %v1287, %v1546
  %v1548 = vpop.f32.mrb[0].mxu0
  %1549 = vmatprep.mubr.bf16.mxu0 0
  %1550 = vmatmul.mubr.bf16.gmra.mrb[0].mxu0 %v1348
  %v1551 = vpop.f32.mrb[0].mxu0
  %v1552 = vadd.f32 %v1287, %v1551
  %v1553 = vpop.f32.mrb[0].mxu0
  %v1554 = vpop.f32.mrb[0].mxu0
  %v1555 = vadd.f32 %v1287, %v1554
  %v1556 = vpop.f32.mrb[0].mxu0
  %1557 = vmatprep.mubr.bf16.mxu0 0
  %1558 = vmatmul.mubr.bf16.gmra.mrb[0].mxu0 %v1351
  %v1559 = vpop.f32.mrb[0].mxu0
  %v1560 = vadd.f32 %v1287, %v1559
  %v1561 = vpop.f32.mrb[0].mxu0
  %v1562 = vpop.f32.mrb[0].mxu0
  %v1563 = vadd.f32 %v1287, %v1562
  %v1564 = vpop.f32.mrb[0].mxu0
  %1565 = vmatprep.mubr.bf16.mxu0 0
  %1566 = vmatmul.mubr.bf16.gmra.mrb[0].mxu0 %v1354
  %v1567 = vpop.f32.mrb[0].mxu0
  %v1568 = vadd.f32 %v1287, %v1567
  %v1569 = vpop.f32.mrb[0].mxu0
  %v1570 = vpop.f32.mrb[0].mxu0
  %v1571 = vadd.f32 %v1287, %v1570
  %v1572 = vpop.f32.mrb[0].mxu0
  %1573 = vmatprep.mubr.bf16.mxu0 0
  %1574 = vmatmul.mubr.bf16.gmra.mrb[0].mxu0 %v1357
  %v1575 = vpop.f32.mrb[0].mxu0
  %v1576 = vadd.f32 %v1287, %v1575
  %v1577 = vpop.f32.mrb[0].mxu0
  %v1578 = vpop.f32.mrb[0].mxu0
  %v1579 = vadd.f32 %v1287, %v1578
  %v1580 = vpop.f32.mrb[0].mxu0
  %1581 = vmatprep.mubr.bf16.mxu0 0
  %1582 = vmatmul.mubr.bf16.gmra.mrb[0].mxu0 %v1360
  %v1583 = vpop.f32.mrb[0].mxu0
  %v1584 = vadd.f32 %v1287, %v1583
  %v1585 = vpop.f32.mrb[0].mxu0
  %v1586 = vpop.f32.mrb[0].mxu0
  %v1587 = vadd.f32 %v1287, %v1586
  %v1588 = vpop.f32.mrb[0].mxu0
  %1589 = vmatprep.mubr.bf16.mxu0 0
  %1590 = vmatmul.mubr.bf16.gmra.mrb[0].mxu0 %v1363
  %v1591 = vpop.f32.mrb[0].mxu0
  %v1592 = vadd.f32 %v1287, %v1591
  %v1593 = vpop.f32.mrb[0].mxu0
  %v1594 = vpop.f32.mrb[0].mxu0
  %v1595 = vadd.f32 %v1287, %v1594
  %v1596 = vpop.f32.mrb[0].mxu0
  %1597 = vmatprep.mubr.bf16.mxu0 0
  %1598 = vmatmul.mubr.bf16.gmra.mrb[0].mxu0 %v1366
  %v1599 = vpop.f32.mrb[0].mxu0
  %v1600 = vadd.f32 %v1287, %v1599
  %v1601 = vpop.f32.mrb[0].mxu0
  %v1602 = vpop.f32.mrb[0].mxu0
  %v1603 = vadd.f32 %v1287, %v1602
  %v1604 = vpop.f32.mrb[0].mxu0
  %1605 = vmatprep.mubr.bf16.mxu0 0
  %1606 = vmatmul.mubr.bf16.gmra.mrb[0].mxu0 %v1369
  %v1607 = vpop.f32.mrb[0].mxu0
  %v1608 = vadd.f32 %v1287, %v1607
  %v1609 = vpop.f32.mrb[0].mxu0
  %v1610 = vpop.f32.mrb[0].mxu0
  %v1611 = vadd.f32 %v1287, %v1610
  %v1612 = vpop.f32.mrb[0].mxu0
  %1613 = vmatprep.mubr.bf16.mxu0 0
  %1614 = vmatmul.mubr.bf16.gmra.mrb[0].mxu0 %v1372
  %v1615 = vpop.f32.mrb[0].mxu0
  %v1616 = vadd.f32 %v1287, %v1615
  %v1617 = vpop.f32.mrb[0].mxu0
  %v1618 = vpop.f32.mrb[0].mxu0
  %v1619 = vadd.f32 %v1287, %v1618
  %v1620 = vpop.f32.mrb[0].mxu0
  %1621 = vmatprep.mubr.bf16.mxu0 0
  %1622 = vmatmul.mubr.bf16.gmra.mrb[0].mxu0 %v1375
  %v1623 = vpop.f32.mrb[0].mxu0
  %v1624 = vadd.f32 %v1287, %v1623
  %v1625 = vpop.f32.mrb[0].mxu0
  %v1626 = vpop.f32.mrb[0].mxu0
  %v1627 = vadd.f32 %v1287, %v1626
  %v1628 = vpop.f32.mrb[0].mxu0
  %1629 = vmatprep.mubr.bf16.mxu0 0
  %1630 = vmatmul.mubr.bf16.gmra.mrb[0].mxu0 %v1378
  %v1631 = vpop.f32.mrb[0].mxu0
  %v1632 = vadd.f32 %v1287, %v1631
  %v1633 = vpop.f32.mrb[0].mxu0
  %v1634 = vpop.f32.mrb[0].mxu0
  %v1635 = vadd.f32 %v1287, %v1634
  %v1636 = vpop.f32.mrb[0].mxu0
  %1637 = vmatprep.mubr.bf16.mxu0 0
  %1638 = vmatmul.mubr.bf16.gmra.mrb[0].mxu0 %v1381
  %v1639 = vpop.f32.mrb[0].mxu0
  %v1640 = vadd.f32 %v1287, %v1639
  %v1641 = vpop.f32.mrb[0].mxu0
  %v1642 = vpop.f32.mrb[0].mxu0
  %v1643 = vadd.f32 %v1287, %v1642
  %v1644 = vpop.f32.mrb[0].mxu0
  %1645 = vmatprep.mubr.bf16.mxu0 0
  %1646 = vmatmul.mubr.bf16.gmra.mrb[0].mxu0 %v1384
  %v1647 = vpop.f32.mrb[0].mxu0
  %v1648 = vadd.f32 %v1287, %v1647
  %v1649 = vpop.f32.mrb[0].mxu0
  %v1650 = vpop.f32.mrb[0].mxu0
  %v1651 = vadd.f32 %v1287, %v1650
  %v1652 = vpop.f32.mrb[0].mxu0
  %1653 = vmatprep.mubr.bf16.mxu0 0
  %1654 = vmatmul.mubr.bf16.gmra.mrb[0].mxu0 %v1387
  %v1655 = vpop.f32.mrb[0].mxu0
  %v1656 = vadd.f32 %v1287, %v1655
  %v1657 = vpop.f32.mrb[0].mxu0
  %v1658 = vpop.f32.mrb[0].mxu0
  %v1659 = vadd.f32 %v1287, %v1658
  %v1660 = vpop.f32.mrb[0].mxu0
  %1661 = vmatprep.mubr.bf16.mxu0 0
  %1662 = vmatmul.mubr.bf16.gmra.mrb[0].mxu0 %v1390
  %v1663 = vpop.f32.mrb[0].mxu0
  %v1664 = vadd.f32 %v1287, %v1663
  %v1665 = vpop.f32.mrb[0].mxu0
  %v1666 = vpop.f32.mrb[0].mxu0
  %v1667 = vadd.f32 %v1287, %v1666
  %v1668 = vpop.f32.mrb[0].mxu0
  %1669 = vmatprep.mubr.bf16.mxu0 0
  %1670 = vmatmul.mubr.bf16.gmra.mrb[0].mxu0 %v1393
  %v1671 = vpop.f32.mrb[0].mxu0
  %v1672 = vadd.f32 %v1287, %v1671
  %v1673 = vpop.f32.mrb[0].mxu0
  %v1674 = vpop.f32.mrb[0].mxu0
  %v1675 = vadd.f32 %v1287, %v1674
  %v1676 = vpop.f32.mrb[0].mxu0
  %1677 = vmatprep.mubr.bf16.mxu0 0
  %1678 = vmatmul.mubr.bf16.gmra.mrb[0].mxu0 %v1396
  %v1679 = vpop.f32.mrb[0].mxu0
  %v1680 = vadd.f32 %v1287, %v1679
  %v1681 = vpop.f32.mrb[0].mxu0
  %v1682 = vpop.f32.mrb[0].mxu0
  %v1683 = vadd.f32 %v1287, %v1682
  %v1684 = vpop.f32.mrb[0].mxu0
  %1685 = vmatprep.mubr.bf16.mxu0 0
  %1686 = vmatmul.mubr.bf16.gmra.mrb[0].mxu0 %v1399
  %v1687 = vpop.f32.mrb[0].mxu0
  %v1688 = vadd.f32 %v1287, %v1687
  %v1689 = vpop.f32.mrb[0].mxu0
  %v1690 = vpop.f32.mrb[0].mxu0
  %v1691 = vadd.f32 %v1287, %v1690
  %v1692 = vpop.f32.mrb[0].mxu0
  %1693 = vdwg.mxu0
  %v1694 = vmax.f32 %v1440, 0.0
  %v1695 = vmax.f32 %v1443, 0.0
  %v1696 = vmax.f32 %v1448, 0.0
  %v1697 = vmax.f32 %v1451, 0.0
  %v1698 = vmax.f32 %v1456, 0.0
  %v1699 = vmax.f32 %v1459, 0.0
  %v1700 = vmax.f32 %v1464, 0.0
  %v1701 = vmax.f32 %v1467, 0.0
  %v1702 = vmax.f32 %v1472, 0.0
  %v1703 = vmax.f32 %v1475, 0.0
  %v1704 = vmax.f32 %v1480, 0.0
  %v1705 = vmax.f32 %v1483, 0.0
  %v1706 = vmax.f32 %v1488, 0.0
  %v1707 = vmax.f32 %v1491, 0.0
  %v1708 = vmax.f32 %v1496, 0.0
  %v1709 = vmax.f32 %v1499, 0.0
  %v1710 = vmax.f32 %v1504, 0.0
  %v1711 = vmax.f32 %v1507, 0.0
  %v1712 = vmax.f32 %v1512, 0.0
  %v1713 = vmax.f32 %v1515, 0.0
  %v1714 = vmax.f32 %v1520, 0.0
  %v1715 = vmax.f32 %v1523, 0.0
  %v1716 = vmax.f32 %v1528, 0.0
  %v1717 = vmax.f32 %v1531, 0.0
  %v1718 = vmax.f32 %v1536, 0.0
  %v1719 = vmax.f32 %v1539, 0.0
  %v1720 = vmax.f32 %v1544, 0.0
  %v1721 = vmax.f32 %v1547, 0.0
  %v1722 = vmax.f32 %v1552, 0.0
  %v1723 = vmax.f32 %v1555, 0.0
  %v1724 = vmax.f32 %v1560, 0.0
  %v1725 = vmax.f32 %v1563, 0.0
  %v1726 = vmax.f32 %v1568, 0.0
  %v1727 = vmax.f32 %v1571, 0.0
  %v1728 = vmax.f32 %v1576, 0.0
  %v1729 = vmax.f32 %v1579, 0.0
  %v1730 = vmax.f32 %v1584, 0.0
  %v1731 = vmax.f32 %v1587, 0.0
  %v1732 = vmax.f32 %v1592, 0.0
  %v1733 = vmax.f32 %v1595, 0.0
  %v1734 = vmax.f32 %v1600, 0.0
  %v1735 = vmax.f32 %v1603, 0.0
  %v1736 = vmax.f32 %v1608, 0.0
  %v1737 = vmax.f32 %v1611, 0.0
  %v1738 = vmax.f32 %v1616, 0.0
  %v1739 = vmax.f32 %v1619, 0.0
  %v1740 = vmax.f32 %v1624, 0.0
  %v1741 = vmax.f32 %v1627, 0.0
  %v1742 = vmax.f32 %v1632, 0.0
  %v1743 = vmax.f32 %v1635, 0.0
  %v1744 = vmax.f32 %v1640, 0.0
  %v1745 = vmax.f32 %v1643, 0.0
  %v1746 = vmax.f32 %v1648, 0.0
  %v1747 = vmax.f32 %v1651, 0.0
  %v1748 = vmax.f32 %v1656, 0.0
  %v1749 = vmax.f32 %v1659, 0.0
  %v1750 = vmax.f32 %v1664, 0.0
  %v1751 = vmax.f32 %v1667, 0.0
  %v1752 = vmax.f32 %v1672, 0.0
  %v1753 = vmax.f32 %v1675, 0.0
  %v1754 = vmax.f32 %v1680, 0.0
  %v1755 = vmax.f32 %v1683, 0.0
  %v1756 = vmax.f32 %v1688, 0.0
  %v1757 = vmax.f32 %v1691, 0.0
  %v1758 = vpack.c.bf16 %v1695, %v1694
  %v1759 = vpack.c.bf16 %v1697, %v1696
  %v1760 = vpack.c.bf16 %v1699, %v1698
  %v1761 = vpack.c.bf16 %v1701, %v1700
  %v1762 = vpack.c.bf16 %v1703, %v1702
  %v1763 = vpack.c.bf16 %v1705, %v1704
  %v1764 = vpack.c.bf16 %v1707, %v1706
  %v1765 = vpack.c.bf16 %v1709, %v1708
  %v1766 = vpack.c.bf16 %v1711, %v1710
  %v1767 = vpack.c.bf16 %v1713, %v1712
  %v1768 = vpack.c.bf16 %v1715, %v1714
  %v1769 = vpack.c.bf16 %v1717, %v1716
  %v1770 = vpack.c.bf16 %v1719, %v1718
  %v1771 = vpack.c.bf16 %v1721, %v1720
  %v1772 = vpack.c.bf16 %v1723, %v1722
  %v1773 = vpack.c.bf16 %v1725, %v1724
  %v1774 = vpack.c.bf16 %v1727, %v1726
  %v1775 = vpack.c.bf16 %v1729, %v1728
  %v1776 = vpack.c.bf16 %v1731, %v1730
  %v1777 = vpack.c.bf16 %v1733, %v1732
  %v1778 = vpack.c.bf16 %v1735, %v1734
  %v1779 = vpack.c.bf16 %v1737, %v1736
  %v1780 = vpack.c.bf16 %v1739, %v1738
  %v1781 = vpack.c.bf16 %v1741, %v1740
  %v1782 = vpack.c.bf16 %v1743, %v1742
  %v1783 = vpack.c.bf16 %v1745, %v1744
  %v1784 = vpack.c.bf16 %v1747, %v1746
  %v1785 = vpack.c.bf16 %v1749, %v1748
  %v1786 = vpack.c.bf16 %v1751, %v1750
  %v1787 = vpack.c.bf16 %v1753, %v1752
  %v1788 = vpack.c.bf16 %v1755, %v1754
  %v1789 = vpack.c.bf16 %v1757, %v1756
  %v1790 = vld [vmem:[%s3] sm:$0xf]
  %v1791 = vld [vmem:[%s3 + $0x4] sm:$0xf]
  %v1792 = vld [vmem:[%s3 + $0x8] sm:$0xf]
  %v1793 = vld [vmem:[%s3 + $0xc] sm:$0xf]
  %v1794 = vld [vmem:[%s3 + $0x10] sm:$0xf]
  %v1795 = vld [vmem:[%s3 + $0x14] sm:$0xf]
  %v1796 = vld [vmem:[%s3 + $0x18] sm:$0xf]
  %v1797 = vld [vmem:[%s3 + $0x1c] sm:$0xf]
  %v1798 = vld [vmem:[%s3 + $0x20] sm:$0xf]
  %v1799 = vld [vmem:[%s3 + $0x24] sm:$0xf]
  %v1800 = vld [vmem:[%s3 + $0x28] sm:$0xf]
  %v1801 = vld [vmem:[%s3 + $0x2c] sm:$0xf]
  %v1802 = vld [vmem:[%s3 + $0x30] sm:$0xf]
  %v1803 = vld [vmem:[%s3 + $0x34] sm:$0xf]
  %v1804 = vld [vmem:[%s3 + $0x38] sm:$0xf]
  %v1805 = vld [vmem:[%s3 + $0x3c] sm:$0xf]
  %v1806 = vld [vmem:[%s4] sm:$0x1]
  %v1808 = vlaneseq
  %v1809 = vshrl.u32 %v1808, 7
  %v1810 = vsub.s32 0, %v1809
  %v1811 = vrot.slane %v1806, %v1810
  %v1829 = vunpack.c.l.b16 %v1790
  %v1830 = vunpack.c.l.b16 %v1791
  %v1831 = vunpack.c.l.b16 %v1792
  %v1832 = vunpack.c.l.b16 %v1793
  %v1833 = vunpack.c.l.b16 %v1794
  %v1834 = vunpack.c.l.b16 %v1795
  %v1835 = vunpack.c.l.b16 %v1796
  %v1836 = vunpack.c.l.b16 %v1797
  %v1837 = vunpack.c.l.b16 %v1798
  %v1838 = vunpack.c.l.b16 %v1799
  %v1839 = vunpack.c.l.b16 %v1800
  %v1840 = vunpack.c.l.b16 %v1801
  %v1841 = vunpack.c.l.b16 %v1802
  %v1842 = vunpack.c.l.b16 %v1803
  %v1843 = vunpack.c.l.b16 %v1804
  %v1844 = vunpack.c.l.b16 %v1805
  %v1845 = vpack.c.b16 %v1830, %v1829
  %v1846 = vpack.c.b16 %v1832, %v1831
  %v1847 = vpack.c.b16 %v1834, %v1833
  %v1848 = vpack.c.b16 %v1836, %v1835
  %v1849 = vpack.c.b16 %v1838, %v1837
  %v1850 = vpack.c.b16 %v1840, %v1839
  %v1851 = vpack.c.b16 %v1842, %v1841
  %v1852 = vpack.c.b16 %v1844, %v1843
  %1861 = vmatprep.subr.bf16.mxu0 0
  %1862 = vmatpush1.bf16.msra.mxu0 %v1845
  %1863 = vmatprep.subr.bf16.mxu0 0
  %1864 = vmatpush1.bf16.msra.mxu0 %v1846
  %1865 = vmatprep.subr.bf16.mxu0 0
  %1866 = vmatpush1.bf16.msra.mxu0 %v1847
  %1867 = vmatprep.subr.bf16.mxu0 0
  %1868 = vmatpush1.bf16.msra.mxu0 %v1848
  %1869 = vmatprep.subr.bf16.mxu0 0
  %1870 = vmatpush1.bf16.msra.mxu0 %v1849
  %1871 = vmatprep.subr.bf16.mxu0 0
  %1872 = vmatpush1.bf16.msra.mxu0 %v1850
  %1873 = vmatprep.subr.bf16.mxu0 0
  %1874 = vmatpush1.bf16.msra.mxu0 %v1851
  %1875 = vmatprep.subr.bf16.mxu0 0
  %1876 = vmatpush1.bf16.msra.mxu0 %v1852
  %1877 = vmatprep.subr.bf16.mxu0 0
  %1878 = vmatpush1.bf16.msra.mxu0 0
  %1879 = vmatprep.subr.bf16.mxu0 0
  %1880 = vmatpush1.bf16.msra.mxu0 0
  %1881 = vmatprep.subr.bf16.mxu0 0
  %1882 = vmatpush1.bf16.msra.mxu0 0
  %1883 = vmatprep.subr.bf16.mxu0 0
  %1884 = vmatpush1.bf16.msra.mxu0 0
  %1885 = vmatprep.subr.bf16.mxu0 0
  %1886 = vmatpush1.bf16.msra.mxu0 0
  %1887 = vmatprep.subr.bf16.mxu0 0
  %1888 = vmatpush1.bf16.msra.mxu0 0
  %1889 = vmatprep.subr.bf16.mxu0 0
  %1890 = vmatpush1.bf16.msra.mxu0 0
  %1891 = vmatprep.subr.bf16.mxu0 0
  %1892 = vmatpush1.bf16.msra.mxu0 0
  %1893 = vmatprep.mubr.bf16.mxu0 0
  %1894 = vmatmul.mubr.bf16.gmra.mrb[0].mxu0 %v1758
  %v1895 = vpop.f32.mrb[0].mxu0
  %v1896 = vadd.f32 %v1811, %v1895
  %v1897 = vpop.f32.mrb[0].mxu0
  %v1898 = vpop.f32.mrb[0].mxu0
  %v1899 = vadd.f32 %v1811, %v1898
  %v1900 = vpop.f32.mrb[0].mxu0
  %1901 = vmatprep.mubr.bf16.mxu0 0
  %1902 = vmatmul.mubr.bf16.gmra.mrb[0].mxu0 %v1759
  %v1903 = vpop.f32.mrb[0].mxu0
  %v1904 = vadd.f32 %v1811, %v1903
  %v1905 = vpop.f32.mrb[0].mxu0
  %v1906 = vpop.f32.mrb[0].mxu0
  %v1907 = vadd.f32 %v1811, %v1906
  %v1908 = vpop.f32.mrb[0].mxu0
  %1909 = vmatprep.mubr.bf16.mxu0 0
  %1910 = vmatmul.mubr.bf16.gmra.mrb[0].mxu0 %v1760
  %v1911 = vpop.f32.mrb[0].mxu0
  %v1912 = vadd.f32 %v1811, %v1911
  %v1913 = vpop.f32.mrb[0].mxu0
  %v1914 = vpop.f32.mrb[0].mxu0
  %v1915 = vadd.f32 %v1811, %v1914
  %v1916 = vpop.f32.mrb[0].mxu0
  %1917 = vmatprep.mubr.bf16.mxu0 0
  %1918 = vmatmul.mubr.bf16.gmra.mrb[0].mxu0 %v1761
  %v1919 = vpop.f32.mrb[0].mxu0
  %v1920 = vadd.f32 %v1811, %v1919
  %v1921 = vpop.f32.mrb[0].mxu0
  %v1922 = vpop.f32.mrb[0].mxu0
  %v1923 = vadd.f32 %v1811, %v1922
  %v1924 = vpop.f32.mrb[0].mxu0
  %1925 = vmatprep.mubr.bf16.mxu0 0
  %1926 = vmatmul.mubr.bf16.gmra.mrb[0].mxu0 %v1762
  %v1927 = vpop.f32.mrb[0].mxu0
  %v1928 = vadd.f32 %v1811, %v1927
  %v1929 = vpop.f32.mrb[0].mxu0
  %v1930 = vpop.f32.mrb[0].mxu0
  %v1931 = vadd.f32 %v1811, %v1930
  %v1932 = vpop.f32.mrb[0].mxu0
  %1933 = vmatprep.mubr.bf16.mxu0 0
  %1934 = vmatmul.mubr.bf16.gmra.mrb[0].mxu0 %v1763
  %v1935 = vpop.f32.mrb[0].mxu0
  %v1936 = vadd.f32 %v1811, %v1935
  %v1937 = vpop.f32.mrb[0].mxu0
  %v1938 = vpop.f32.mrb[0].mxu0
  %v1939 = vadd.f32 %v1811, %v1938
  %v1940 = vpop.f32.mrb[0].mxu0
  %1941 = vmatprep.mubr.bf16.mxu0 0
  %1942 = vmatmul.mubr.bf16.gmra.mrb[0].mxu0 %v1764
  %v1943 = vpop.f32.mrb[0].mxu0
  %v1944 = vadd.f32 %v1811, %v1943
  %v1945 = vpop.f32.mrb[0].mxu0
  %v1946 = vpop.f32.mrb[0].mxu0
  %v1947 = vadd.f32 %v1811, %v1946
  %v1948 = vpop.f32.mrb[0].mxu0
  %1949 = vmatprep.mubr.bf16.mxu0 0
  %1950 = vmatmul.mubr.bf16.gmra.mrb[0].mxu0 %v1765
  %v1951 = vpop.f32.mrb[0].mxu0
  %v1952 = vadd.f32 %v1811, %v1951
  %v1953 = vpop.f32.mrb[0].mxu0
  %v1954 = vpop.f32.mrb[0].mxu0
  %v1955 = vadd.f32 %v1811, %v1954
  %v1956 = vpop.f32.mrb[0].mxu0
  %1957 = vmatprep.mubr.bf16.mxu0 0
  %1958 = vmatmul.mubr.bf16.gmra.mrb[0].mxu0 %v1766
  %v1959 = vpop.f32.mrb[0].mxu0
  %v1960 = vadd.f32 %v1811, %v1959
  %v1961 = vpop.f32.mrb[0].mxu0
  %v1962 = vpop.f32.mrb[0].mxu0
  %v1963 = vadd.f32 %v1811, %v1962
  %v1964 = vpop.f32.mrb[0].mxu0
  %1965 = vmatprep.mubr.bf16.mxu0 0
  %1966 = vmatmul.mubr.bf16.gmra.mrb[0].mxu0 %v1767
  %v1967 = vpop.f32.mrb[0].mxu0
  %v1968 = vadd.f32 %v1811, %v1967
  %v1969 = vpop.f32.mrb[0].mxu0
  %v1970 = vpop.f32.mrb[0].mxu0
  %v1971 = vadd.f32 %v1811, %v1970
  %v1972 = vpop.f32.mrb[0].mxu0
  %1973 = vmatprep.mubr.bf16.mxu0 0
  %1974 = vmatmul.mubr.bf16.gmra.mrb[0].mxu0 %v1768
  %v1975 = vpop.f32.mrb[0].mxu0
  %v1976 = vadd.f32 %v1811, %v1975
  %v1977 = vpop.f32.mrb[0].mxu0
  %v1978 = vpop.f32.mrb[0].mxu0
  %v1979 = vadd.f32 %v1811, %v1978
  %v1980 = vpop.f32.mrb[0].mxu0
  %1981 = vmatprep.mubr.bf16.mxu0 0
  %1982 = vmatmul.mubr.bf16.gmra.mrb[0].mxu0 %v1769
  %v1983 = vpop.f32.mrb[0].mxu0
  %v1984 = vadd.f32 %v1811, %v1983
  %v1985 = vpop.f32.mrb[0].mxu0
  %v1986 = vpop.f32.mrb[0].mxu0
  %v1987 = vadd.f32 %v1811, %v1986
  %v1988 = vpop.f32.mrb[0].mxu0
  %1989 = vmatprep.mubr.bf16.mxu0 0
  %1990 = vmatmul.mubr.bf16.gmra.mrb[0].mxu0 %v1770
  %v1991 = vpop.f32.mrb[0].mxu0
  %v1992 = vadd.f32 %v1811, %v1991
  %v1993 = vpop.f32.mrb[0].mxu0
  %v1994 = vpop.f32.mrb[0].mxu0
  %v1995 = vadd.f32 %v1811, %v1994
  %v1996 = vpop.f32.mrb[0].mxu0
  %1997 = vmatprep.mubr.bf16.mxu0 0
  %1998 = vmatmul.mubr.bf16.gmra.mrb[0].mxu0 %v1771
  %v1999 = vpop.f32.mrb[0].mxu0
  %v2000 = vadd.f32 %v1811, %v1999
  %v2001 = vpop.f32.mrb[0].mxu0
  %v2002 = vpop.f32.mrb[0].mxu0
  %v2003 = vadd.f32 %v1811, %v2002
  %v2004 = vpop.f32.mrb[0].mxu0
  %2005 = vmatprep.mubr.bf16.mxu0 0
  %2006 = vmatmul.mubr.bf16.gmra.mrb[0].mxu0 %v1772
  %v2007 = vpop.f32.mrb[0].mxu0
  %v2008 = vadd.f32 %v1811, %v2007
  %v2009 = vpop.f32.mrb[0].mxu0
  %v2010 = vpop.f32.mrb[0].mxu0
  %v2011 = vadd.f32 %v1811, %v2010
  %v2012 = vpop.f32.mrb[0].mxu0
  %2013 = vmatprep.mubr.bf16.mxu0 0
  %2014 = vmatmul.mubr.bf16.gmra.mrb[0].mxu0 %v1773
  %v2015 = vpop.f32.mrb[0].mxu0
  %v2016 = vadd.f32 %v1811, %v2015
  %v2017 = vpop.f32.mrb[0].mxu0
  %v2018 = vpop.f32.mrb[0].mxu0
  %v2019 = vadd.f32 %v1811, %v2018
  %v2020 = vpop.f32.mrb[0].mxu0
  %2021 = vmatprep.mubr.bf16.mxu0 0
  %2022 = vmatmul.mubr.bf16.gmra.mrb[0].mxu0 %v1774
  %v2023 = vpop.f32.mrb[0].mxu0
  %v2024 = vadd.f32 %v1811, %v2023
  %v2025 = vpop.f32.mrb[0].mxu0
  %v2026 = vpop.f32.mrb[0].mxu0
  %v2027 = vadd.f32 %v1811, %v2026
  %v2028 = vpop.f32.mrb[0].mxu0
  %2029 = vmatprep.mubr.bf16.mxu0 0
  %2030 = vmatmul.mubr.bf16.gmra.mrb[0].mxu0 %v1775
  %v2031 = vpop.f32.mrb[0].mxu0
  %v2032 = vadd.f32 %v1811, %v2031
  %v2033 = vpop.f32.mrb[0].mxu0
  %v2034 = vpop.f32.mrb[0].mxu0
  %v2035 = vadd.f32 %v1811, %v2034
  %v2036 = vpop.f32.mrb[0].mxu0
  %2037 = vmatprep.mubr.bf16.mxu0 0
  %2038 = vmatmul.mubr.bf16.gmra.mrb[0].mxu0 %v1776
  %v2039 = vpop.f32.mrb[0].mxu0
  %v2040 = vadd.f32 %v1811, %v2039
  %v2041 = vpop.f32.mrb[0].mxu0
  %v2042 = vpop.f32.mrb[0].mxu0
  %v2043 = vadd.f32 %v1811, %v2042
  %v2044 = vpop.f32.mrb[0].mxu0
  %2045 = vmatprep.mubr.bf16.mxu0 0
  %2046 = vmatmul.mubr.bf16.gmra.mrb[0].mxu0 %v1777
  %v2047 = vpop.f32.mrb[0].mxu0
  %v2048 = vadd.f32 %v1811, %v2047
  %v2049 = vpop.f32.mrb[0].mxu0
  %v2050 = vpop.f32.mrb[0].mxu0
  %v2051 = vadd.f32 %v1811, %v2050
  %v2052 = vpop.f32.mrb[0].mxu0
  %2053 = vmatprep.mubr.bf16.mxu0 0
  %2054 = vmatmul.mubr.bf16.gmra.mrb[0].mxu0 %v1778
  %v2055 = vpop.f32.mrb[0].mxu0
  %v2056 = vadd.f32 %v1811, %v2055
  %v2057 = vpop.f32.mrb[0].mxu0
  %v2058 = vpop.f32.mrb[0].mxu0
  %v2059 = vadd.f32 %v1811, %v2058
  %v2060 = vpop.f32.mrb[0].mxu0
  %2061 = vmatprep.mubr.bf16.mxu0 0
  %2062 = vmatmul.mubr.bf16.gmra.mrb[0].mxu0 %v1779
  %v2063 = vpop.f32.mrb[0].mxu0
  %v2064 = vadd.f32 %v1811, %v2063
  %v2065 = vpop.f32.mrb[0].mxu0
  %v2066 = vpop.f32.mrb[0].mxu0
  %v2067 = vadd.f32 %v1811, %v2066
  %v2068 = vpop.f32.mrb[0].mxu0
  %2069 = vmatprep.mubr.bf16.mxu0 0
  %2070 = vmatmul.mubr.bf16.gmra.mrb[0].mxu0 %v1780
  %v2071 = vpop.f32.mrb[0].mxu0
  %v2072 = vadd.f32 %v1811, %v2071
  %v2073 = vpop.f32.mrb[0].mxu0
  %v2074 = vpop.f32.mrb[0].mxu0
  %v2075 = vadd.f32 %v1811, %v2074
  %v2076 = vpop.f32.mrb[0].mxu0
  %2077 = vmatprep.mubr.bf16.mxu0 0
  %2078 = vmatmul.mubr.bf16.gmra.mrb[0].mxu0 %v1781
  %v2079 = vpop.f32.mrb[0].mxu0
  %v2080 = vadd.f32 %v1811, %v2079
  %v2081 = vpop.f32.mrb[0].mxu0
  %v2082 = vpop.f32.mrb[0].mxu0
  %v2083 = vadd.f32 %v1811, %v2082
  %v2084 = vpop.f32.mrb[0].mxu0
  %2085 = vmatprep.mubr.bf16.mxu0 0
  %2086 = vmatmul.mubr.bf16.gmra.mrb[0].mxu0 %v1782
  %v2087 = vpop.f32.mrb[0].mxu0
  %v2088 = vadd.f32 %v1811, %v2087
  %v2089 = vpop.f32.mrb[0].mxu0
  %v2090 = vpop.f32.mrb[0].mxu0
  %v2091 = vadd.f32 %v1811, %v2090
  %v2092 = vpop.f32.mrb[0].mxu0
  %2093 = vmatprep.mubr.bf16.mxu0 0
  %2094 = vmatmul.mubr.bf16.gmra.mrb[0].mxu0 %v1783
  %v2095 = vpop.f32.mrb[0].mxu0
  %v2096 = vadd.f32 %v1811, %v2095
  %v2097 = vpop.f32.mrb[0].mxu0
  %v2098 = vpop.f32.mrb[0].mxu0
  %v2099 = vadd.f32 %v1811, %v2098
  %v2100 = vpop.f32.mrb[0].mxu0
  %2101 = vmatprep.mubr.bf16.mxu0 0
  %2102 = vmatmul.mubr.bf16.gmra.mrb[0].mxu0 %v1784
  %v2103 = vpop.f32.mrb[0].mxu0
  %v2104 = vadd.f32 %v1811, %v2103
  %v2105 = vpop.f32.mrb[0].mxu0
  %v2106 = vpop.f32.mrb[0].mxu0
  %v2107 = vadd.f32 %v1811, %v2106
  %v2108 = vpop.f32.mrb[0].mxu0
  %2109 = vmatprep.mubr.bf16.mxu0 0
  %2110 = vmatmul.mubr.bf16.gmra.mrb[0].mxu0 %v1785
  %v2111 = vpop.f32.mrb[0].mxu0
  %v2112 = vadd.f32 %v1811, %v2111
  %v2113 = vpop.f32.mrb[0].mxu0
  %v2114 = vpop.f32.mrb[0].mxu0
  %v2115 = vadd.f32 %v1811, %v2114
  %v2116 = vpop.f32.mrb[0].mxu0
  %2117 = vmatprep.mubr.bf16.mxu0 0
  %2118 = vmatmul.mubr.bf16.gmra.mrb[0].mxu0 %v1786
  %v2119 = vpop.f32.mrb[0].mxu0
  %v2120 = vadd.f32 %v1811, %v2119
  %v2121 = vpop.f32.mrb[0].mxu0
  %v2122 = vpop.f32.mrb[0].mxu0
  %v2123 = vadd.f32 %v1811, %v2122
  %v2124 = vpop.f32.mrb[0].mxu0
  %2125 = vmatprep.mubr.bf16.mxu0 0
  %2126 = vmatmul.mubr.bf16.gmra.mrb[0].mxu0 %v1787
  %v2127 = vpop.f32.mrb[0].mxu0
  %v2128 = vadd.f32 %v1811, %v2127
  %v2129 = vpop.f32.mrb[0].mxu0
  %v2130 = vpop.f32.mrb[0].mxu0
  %v2131 = vadd.f32 %v1811, %v2130
  %v2132 = vpop.f32.mrb[0].mxu0
  %2133 = vmatprep.mubr.bf16.mxu0 0
  %2134 = vmatmul.mubr.bf16.gmra.mrb[0].mxu0 %v1788
  %v2135 = vpop.f32.mrb[0].mxu0
  %v2136 = vadd.f32 %v1811, %v2135
  %v2137 = vpop.f32.mrb[0].mxu0
  %v2138 = vpop.f32.mrb[0].mxu0
  %v2139 = vadd.f32 %v1811, %v2138
  %v2140 = vpop.f32.mrb[0].mxu0
  %2141 = vmatprep.mubr.bf16.mxu0 0
  %2142 = vmatmul.mubr.bf16.gmra.mrb[0].mxu0 %v1789
  %v2143 = vpop.f32.mrb[0].mxu0
  %v2144 = vadd.f32 %v1811, %v2143
  %v2145 = vpop.f32.mrb[0].mxu0
  %v2146 = vpop.f32.mrb[0].mxu0
  %v2147 = vadd.f32 %v1811, %v2146
  %v2148 = vpop.f32.mrb[0].mxu0
  %2149 = vdwg.mxu0
  %v2150 = vmax.f32 %v1896, 0.0
  %v2151 = vmax.f32 %v1899, 0.0
  %v2152 = vmax.f32 %v1904, 0.0
  %v2153 = vmax.f32 %v1907, 0.0
  %v2154 = vmax.f32 %v1912, 0.0
  %v2155 = vmax.f32 %v1915, 0.0
  %v2156 = vmax.f32 %v1920, 0.0
  %v2157 = vmax.f32 %v1923, 0.0
  %v2158 = vmax.f32 %v1928, 0.0
  %v2159 = vmax.f32 %v1931, 0.0
  %v2160 = vmax.f32 %v1936, 0.0
  %v2161 = vmax.f32 %v1939, 0.0
  %v2162 = vmax.f32 %v1944, 0.0
  %v2163 = vmax.f32 %v1947, 0.0
  %v2164 = vmax.f32 %v1952, 0.0
  %v2165 = vmax.f32 %v1955, 0.0
  %v2166 = vmax.f32 %v1960, 0.0
  %v2167 = vmax.f32 %v1963, 0.0
  %v2168 = vmax.f32 %v1968, 0.0
  %v2169 = vmax.f32 %v1971, 0.0
  %v2170 = vmax.f32 %v1976, 0.0
  %v2171 = vmax.f32 %v1979, 0.0
  %v2172 = vmax.f32 %v1984, 0.0
  %v2173 = vmax.f32 %v1987, 0.0
  %v2174 = vmax.f32 %v1992, 0.0
  %v2175 = vmax.f32 %v1995, 0.0
  %v2176 = vmax.f32 %v2000, 0.0
  %v2177 = vmax.f32 %v2003, 0.0
  %v2178 = vmax.f32 %v2008, 0.0
  %v2179 = vmax.f32 %v2011, 0.0
  %v2180 = vmax.f32 %v2016, 0.0
  %v2181 = vmax.f32 %v2019, 0.0
  %v2182 = vmax.f32 %v2024, 0.0
  %v2183 = vmax.f32 %v2027, 0.0
  %v2184 = vmax.f32 %v2032, 0.0
  %v2185 = vmax.f32 %v2035, 0.0
  %v2186 = vmax.f32 %v2040, 0.0
  %v2187 = vmax.f32 %v2043, 0.0
  %v2188 = vmax.f32 %v2048, 0.0
  %v2189 = vmax.f32 %v2051, 0.0
  %v2190 = vmax.f32 %v2056, 0.0
  %v2191 = vmax.f32 %v2059, 0.0
  %v2192 = vmax.f32 %v2064, 0.0
  %v2193 = vmax.f32 %v2067, 0.0
  %v2194 = vmax.f32 %v2072, 0.0
  %v2195 = vmax.f32 %v2075, 0.0
  %v2196 = vmax.f32 %v2080, 0.0
  %v2197 = vmax.f32 %v2083, 0.0
  %v2198 = vmax.f32 %v2088, 0.0
  %v2199 = vmax.f32 %v2091, 0.0
  %v2200 = vmax.f32 %v2096, 0.0
  %v2201 = vmax.f32 %v2099, 0.0
  %v2202 = vmax.f32 %v2104, 0.0
  %v2203 = vmax.f32 %v2107, 0.0
  %v2204 = vmax.f32 %v2112, 0.0
  %v2205 = vmax.f32 %v2115, 0.0
  %v2206 = vmax.f32 %v2120, 0.0
  %v2207 = vmax.f32 %v2123, 0.0
  %v2208 = vmax.f32 %v2128, 0.0
  %v2209 = vmax.f32 %v2131, 0.0
  %v2210 = vmax.f32 %v2136, 0.0
  %v2211 = vmax.f32 %v2139, 0.0
  %v2212 = vmax.f32 %v2144, 0.0
  %v2213 = vmax.f32 %v2147, 0.0
  %v2214 = vpack.c.bf16 %v2151, %v2150
  %v2215 = vpack.c.bf16 %v2153, %v2152
  %v2216 = vpack.c.bf16 %v2155, %v2154
  %v2217 = vpack.c.bf16 %v2157, %v2156
  %v2218 = vpack.c.bf16 %v2159, %v2158
  %v2219 = vpack.c.bf16 %v2161, %v2160
  %v2220 = vpack.c.bf16 %v2163, %v2162
  %v2221 = vpack.c.bf16 %v2165, %v2164
  %v2222 = vpack.c.bf16 %v2167, %v2166
  %v2223 = vpack.c.bf16 %v2169, %v2168
  %v2224 = vpack.c.bf16 %v2171, %v2170
  %v2225 = vpack.c.bf16 %v2173, %v2172
  %v2226 = vpack.c.bf16 %v2175, %v2174
  %v2227 = vpack.c.bf16 %v2177, %v2176
  %v2228 = vpack.c.bf16 %v2179, %v2178
  %v2229 = vpack.c.bf16 %v2181, %v2180
  %v2230 = vpack.c.bf16 %v2183, %v2182
  %v2231 = vpack.c.bf16 %v2185, %v2184
  %v2232 = vpack.c.bf16 %v2187, %v2186
  %v2233 = vpack.c.bf16 %v2189, %v2188
  %v2234 = vpack.c.bf16 %v2191, %v2190
  %v2235 = vpack.c.bf16 %v2193, %v2192
  %v2236 = vpack.c.bf16 %v2195, %v2194
  %v2237 = vpack.c.bf16 %v2197, %v2196
  %v2238 = vpack.c.bf16 %v2199, %v2198
  %v2239 = vpack.c.bf16 %v2201, %v2200
  %v2240 = vpack.c.bf16 %v2203, %v2202
  %v2241 = vpack.c.bf16 %v2205, %v2204
  %v2242 = vpack.c.bf16 %v2207, %v2206
  %v2243 = vpack.c.bf16 %v2209, %v2208
  %v2244 = vpack.c.bf16 %v2211, %v2210
  %v2245 = vpack.c.bf16 %v2213, %v2212
  %v2246 = vld [vmem:[%s5] sm:$0xf]
  %v2247 = vld [vmem:[%s5 + $0x4] sm:$0xf]
  %v2248 = vld [vmem:[%s5 + $0x8] sm:$0xf]
  %v2249 = vld [vmem:[%s5 + $0xc] sm:$0xf]
  %v2250 = vld [vmem:[%s5 + $0x10] sm:$0xf]
  %v2251 = vld [vmem:[%s5 + $0x14] sm:$0xf]
  %v2252 = vld [vmem:[%s5 + $0x18] sm:$0xf]
  %v2253 = vld [vmem:[%s5 + $0x1c] sm:$0xf]
  %v2254 = vld [vmem:[%s5 + $0x20] sm:$0xf]
  %v2255 = vld [vmem:[%s5 + $0x24] sm:$0xf]
  %v2256 = vld [vmem:[%s5 + $0x28] sm:$0xf]
  %v2257 = vld [vmem:[%s5 + $0x2c] sm:$0xf]
  %v2258 = vld [vmem:[%s5 + $0x30] sm:$0xf]
  %v2259 = vld [vmem:[%s5 + $0x34] sm:$0xf]
  %v2260 = vld [vmem:[%s5 + $0x38] sm:$0xf]
  %v2261 = vld [vmem:[%s5 + $0x3c] sm:$0xf]
  %v2262 = vld [vmem:[%s6] sm:$0x1]
  %v2264 = vlaneseq
  %v2265 = vshrl.u32 %v2264, 7
  %v2266 = vsub.s32 0, %v2265
  %v2267 = vrot.slane %v2262, %v2266
  %v2285 = vunpack.c.l.b16 %v2246
  %v2286 = vunpack.c.l.b16 %v2247
  %v2287 = vunpack.c.l.b16 %v2248
  %v2288 = vunpack.c.l.b16 %v2249
  %v2289 = vunpack.c.l.b16 %v2250
  %v2290 = vunpack.c.l.b16 %v2251
  %v2291 = vunpack.c.l.b16 %v2252
  %v2292 = vunpack.c.l.b16 %v2253
  %v2293 = vunpack.c.l.b16 %v2254
  %v2294 = vunpack.c.l.b16 %v2255
  %v2295 = vunpack.c.l.b16 %v2256
  %v2296 = vunpack.c.l.b16 %v2257
  %v2297 = vunpack.c.l.b16 %v2258
  %v2298 = vunpack.c.l.b16 %v2259
  %v2299 = vunpack.c.l.b16 %v2260
  %v2300 = vunpack.c.l.b16 %v2261
  %v2301 = vpack.c.b16 %v2286, %v2285
  %v2302 = vpack.c.b16 %v2288, %v2287
  %v2303 = vpack.c.b16 %v2290, %v2289
  %v2304 = vpack.c.b16 %v2292, %v2291
  %v2305 = vpack.c.b16 %v2294, %v2293
  %v2306 = vpack.c.b16 %v2296, %v2295
  %v2307 = vpack.c.b16 %v2298, %v2297
  %v2308 = vpack.c.b16 %v2300, %v2299
  %2317 = vmatprep.subr.bf16.mxu0 0
  %2318 = vmatpush1.bf16.msra.mxu0 %v2301
  %2319 = vmatprep.subr.bf16.mxu0 0
  %2320 = vmatpush1.bf16.msra.mxu0 %v2302
  %2321 = vmatprep.subr.bf16.mxu0 0
  %2322 = vmatpush1.bf16.msra.mxu0 %v2303
  %2323 = vmatprep.subr.bf16.mxu0 0
  %2324 = vmatpush1.bf16.msra.mxu0 %v2304
  %2325 = vmatprep.subr.bf16.mxu0 0
  %2326 = vmatpush1.bf16.msra.mxu0 %v2305
  %2327 = vmatprep.subr.bf16.mxu0 0
  %2328 = vmatpush1.bf16.msra.mxu0 %v2306
  %2329 = vmatprep.subr.bf16.mxu0 0
  %2330 = vmatpush1.bf16.msra.mxu0 %v2307
  %2331 = vmatprep.subr.bf16.mxu0 0
  %2332 = vmatpush1.bf16.msra.mxu0 %v2308
  %2333 = vmatprep.subr.bf16.mxu0 0
  %2334 = vmatpush1.bf16.msra.mxu0 0
  %2335 = vmatprep.subr.bf16.mxu0 0
  %2336 = vmatpush1.bf16.msra.mxu0 0
  %2337 = vmatprep.subr.bf16.mxu0 0
  %2338 = vmatpush1.bf16.msra.mxu0 0
  %2339 = vmatprep.subr.bf16.mxu0 0
  %2340 = vmatpush1.bf16.msra.mxu0 0
  %2341 = vmatprep.subr.bf16.mxu0 0
  %2342 = vmatpush1.bf16.msra.mxu0 0
  %2343 = vmatprep.subr.bf16.mxu0 0
  %2344 = vmatpush1.bf16.msra.mxu0 0
  %2345 = vmatprep.subr.bf16.mxu0 0
  %2346 = vmatpush1.bf16.msra.mxu0 0
  %2347 = vmatprep.subr.bf16.mxu0 0
  %2348 = vmatpush1.bf16.msra.mxu0 0
  %2349 = vmatprep.mubr.bf16.mxu0 0
  %2350 = vmatmul.mubr.bf16.gmra.mrb[0].mxu0 %v2214
  %v2351 = vpop.f32.mrb[0].mxu0
  %v2352 = vadd.f32 %v2267, %v2351
  %v2353 = vpop.f32.mrb[0].mxu0
  %v2354 = vpop.f32.mrb[0].mxu0
  %v2355 = vadd.f32 %v2267, %v2354
  %v2356 = vpop.f32.mrb[0].mxu0
  %2357 = vmatprep.mubr.bf16.mxu0 0
  %2358 = vmatmul.mubr.bf16.gmra.mrb[0].mxu0 %v2215
  %v2359 = vpop.f32.mrb[0].mxu0
  %v2360 = vadd.f32 %v2267, %v2359
  %v2361 = vpop.f32.mrb[0].mxu0
  %v2362 = vpop.f32.mrb[0].mxu0
  %v2363 = vadd.f32 %v2267, %v2362
  %v2364 = vpop.f32.mrb[0].mxu0
  %2365 = vmatprep.mubr.bf16.mxu0 0
  %2366 = vmatmul.mubr.bf16.gmra.mrb[0].mxu0 %v2216
  %v2367 = vpop.f32.mrb[0].mxu0
  %v2368 = vadd.f32 %v2267, %v2367
  %v2369 = vpop.f32.mrb[0].mxu0
  %v2370 = vpop.f32.mrb[0].mxu0
  %v2371 = vadd.f32 %v2267, %v2370
  %v2372 = vpop.f32.mrb[0].mxu0
  %2373 = vmatprep.mubr.bf16.mxu0 0
  %2374 = vmatmul.mubr.bf16.gmra.mrb[0].mxu0 %v2217
  %v2375 = vpop.f32.mrb[0].mxu0
  %v2376 = vadd.f32 %v2267, %v2375
  %v2377 = vpop.f32.mrb[0].mxu0
  %v2378 = vpop.f32.mrb[0].mxu0
  %v2379 = vadd.f32 %v2267, %v2378
  %v2380 = vpop.f32.mrb[0].mxu0
  %2381 = vmatprep.mubr.bf16.mxu0 0
  %2382 = vmatmul.mubr.bf16.gmra.mrb[0].mxu0 %v2218
  %v2383 = vpop.f32.mrb[0].mxu0
  %v2384 = vadd.f32 %v2267, %v2383
  %v2385 = vpop.f32.mrb[0].mxu0
  %v2386 = vpop.f32.mrb[0].mxu0
  %v2387 = vadd.f32 %v2267, %v2386
  %v2388 = vpop.f32.mrb[0].mxu0
  %2389 = vmatprep.mubr.bf16.mxu0 0
  %2390 = vmatmul.mubr.bf16.gmra.mrb[0].mxu0 %v2219
  %v2391 = vpop.f32.mrb[0].mxu0
  %v2392 = vadd.f32 %v2267, %v2391
  %v2393 = vpop.f32.mrb[0].mxu0
  %v2394 = vpop.f32.mrb[0].mxu0
  %v2395 = vadd.f32 %v2267, %v2394
  %v2396 = vpop.f32.mrb[0].mxu0
  %2397 = vmatprep.mubr.bf16.mxu0 0
  %2398 = vmatmul.mubr.bf16.gmra.mrb[0].mxu0 %v2220
  %v2399 = vpop.f32.mrb[0].mxu0
  %v2400 = vadd.f32 %v2267, %v2399
  %v2401 = vpop.f32.mrb[0].mxu0
  %v2402 = vpop.f32.mrb[0].mxu0
  %v2403 = vadd.f32 %v2267, %v2402
  %v2404 = vpop.f32.mrb[0].mxu0
  %2405 = vmatprep.mubr.bf16.mxu0 0
  %2406 = vmatmul.mubr.bf16.gmra.mrb[0].mxu0 %v2221
  %v2407 = vpop.f32.mrb[0].mxu0
  %v2408 = vadd.f32 %v2267, %v2407
  %v2409 = vpop.f32.mrb[0].mxu0
  %v2410 = vpop.f32.mrb[0].mxu0
  %v2411 = vadd.f32 %v2267, %v2410
  %v2412 = vpop.f32.mrb[0].mxu0
  %2413 = vmatprep.mubr.bf16.mxu0 0
  %2414 = vmatmul.mubr.bf16.gmra.mrb[0].mxu0 %v2222
  %v2415 = vpop.f32.mrb[0].mxu0
  %v2416 = vadd.f32 %v2267, %v2415
  %v2417 = vpop.f32.mrb[0].mxu0
  %v2418 = vpop.f32.mrb[0].mxu0
  %v2419 = vadd.f32 %v2267, %v2418
  %v2420 = vpop.f32.mrb[0].mxu0
  %2421 = vmatprep.mubr.bf16.mxu0 0
  %2422 = vmatmul.mubr.bf16.gmra.mrb[0].mxu0 %v2223
  %v2423 = vpop.f32.mrb[0].mxu0
  %v2424 = vadd.f32 %v2267, %v2423
  %v2425 = vpop.f32.mrb[0].mxu0
  %v2426 = vpop.f32.mrb[0].mxu0
  %v2427 = vadd.f32 %v2267, %v2426
  %v2428 = vpop.f32.mrb[0].mxu0
  %2429 = vmatprep.mubr.bf16.mxu0 0
  %2430 = vmatmul.mubr.bf16.gmra.mrb[0].mxu0 %v2224
  %v2431 = vpop.f32.mrb[0].mxu0
  %v2432 = vadd.f32 %v2267, %v2431
  %v2433 = vpop.f32.mrb[0].mxu0
  %v2434 = vpop.f32.mrb[0].mxu0
  %v2435 = vadd.f32 %v2267, %v2434
  %v2436 = vpop.f32.mrb[0].mxu0
  %2437 = vmatprep.mubr.bf16.mxu0 0
  %2438 = vmatmul.mubr.bf16.gmra.mrb[0].mxu0 %v2225
  %v2439 = vpop.f32.mrb[0].mxu0
  %v2440 = vadd.f32 %v2267, %v2439
  %v2441 = vpop.f32.mrb[0].mxu0
  %v2442 = vpop.f32.mrb[0].mxu0
  %v2443 = vadd.f32 %v2267, %v2442
  %v2444 = vpop.f32.mrb[0].mxu0
  %2445 = vmatprep.mubr.bf16.mxu0 0
  %2446 = vmatmul.mubr.bf16.gmra.mrb[0].mxu0 %v2226
  %v2447 = vpop.f32.mrb[0].mxu0
  %v2448 = vadd.f32 %v2267, %v2447
  %v2449 = vpop.f32.mrb[0].mxu0
  %v2450 = vpop.f32.mrb[0].mxu0
  %v2451 = vadd.f32 %v2267, %v2450
  %v2452 = vpop.f32.mrb[0].mxu0
  %2453 = vmatprep.mubr.bf16.mxu0 0
  %2454 = vmatmul.mubr.bf16.gmra.mrb[0].mxu0 %v2227
  %v2455 = vpop.f32.mrb[0].mxu0
  %v2456 = vadd.f32 %v2267, %v2455
  %v2457 = vpop.f32.mrb[0].mxu0
  %v2458 = vpop.f32.mrb[0].mxu0
  %v2459 = vadd.f32 %v2267, %v2458
  %v2460 = vpop.f32.mrb[0].mxu0
  %2461 = vmatprep.mubr.bf16.mxu0 0
  %2462 = vmatmul.mubr.bf16.gmra.mrb[0].mxu0 %v2228
  %v2463 = vpop.f32.mrb[0].mxu0
  %v2464 = vadd.f32 %v2267, %v2463
  %v2465 = vpop.f32.mrb[0].mxu0
  %v2466 = vpop.f32.mrb[0].mxu0
  %v2467 = vadd.f32 %v2267, %v2466
  %v2468 = vpop.f32.mrb[0].mxu0
  %2469 = vmatprep.mubr.bf16.mxu0 0
  %2470 = vmatmul.mubr.bf16.gmra.mrb[0].mxu0 %v2229
  %v2471 = vpop.f32.mrb[0].mxu0
  %v2472 = vadd.f32 %v2267, %v2471
  %v2473 = vpop.f32.mrb[0].mxu0
  %v2474 = vpop.f32.mrb[0].mxu0
  %v2475 = vadd.f32 %v2267, %v2474
  %v2476 = vpop.f32.mrb[0].mxu0
  %2477 = vmatprep.mubr.bf16.mxu0 0
  %2478 = vmatmul.mubr.bf16.gmra.mrb[0].mxu0 %v2230
  %v2479 = vpop.f32.mrb[0].mxu0
  %v2480 = vadd.f32 %v2267, %v2479
  %v2481 = vpop.f32.mrb[0].mxu0
  %v2482 = vpop.f32.mrb[0].mxu0
  %v2483 = vadd.f32 %v2267, %v2482
  %v2484 = vpop.f32.mrb[0].mxu0
  %2485 = vmatprep.mubr.bf16.mxu0 0
  %2486 = vmatmul.mubr.bf16.gmra.mrb[0].mxu0 %v2231
  %v2487 = vpop.f32.mrb[0].mxu0
  %v2488 = vadd.f32 %v2267, %v2487
  %v2489 = vpop.f32.mrb[0].mxu0
  %v2490 = vpop.f32.mrb[0].mxu0
  %v2491 = vadd.f32 %v2267, %v2490
  %v2492 = vpop.f32.mrb[0].mxu0
  %2493 = vmatprep.mubr.bf16.mxu0 0
  %2494 = vmatmul.mubr.bf16.gmra.mrb[0].mxu0 %v2232
  %v2495 = vpop.f32.mrb[0].mxu0
  %v2496 = vadd.f32 %v2267, %v2495
  %v2497 = vpop.f32.mrb[0].mxu0
  %v2498 = vpop.f32.mrb[0].mxu0
  %v2499 = vadd.f32 %v2267, %v2498
  %v2500 = vpop.f32.mrb[0].mxu0
  %2501 = vmatprep.mubr.bf16.mxu0 0
  %2502 = vmatmul.mubr.bf16.gmra.mrb[0].mxu0 %v2233
  %v2503 = vpop.f32.mrb[0].mxu0
  %v2504 = vadd.f32 %v2267, %v2503
  %v2505 = vpop.f32.mrb[0].mxu0
  %v2506 = vpop.f32.mrb[0].mxu0
  %v2507 = vadd.f32 %v2267, %v2506
  %v2508 = vpop.f32.mrb[0].mxu0
  %2509 = vmatprep.mubr.bf16.mxu0 0
  %2510 = vmatmul.mubr.bf16.gmra.mrb[0].mxu0 %v2234
  %v2511 = vpop.f32.mrb[0].mxu0
  %v2512 = vadd.f32 %v2267, %v2511
  %v2513 = vpop.f32.mrb[0].mxu0
  %v2514 = vpop.f32.mrb[0].mxu0
  %v2515 = vadd.f32 %v2267, %v2514
  %v2516 = vpop.f32.mrb[0].mxu0
  %2517 = vmatprep.mubr.bf16.mxu0 0
  %2518 = vmatmul.mubr.bf16.gmra.mrb[0].mxu0 %v2235
  %v2519 = vpop.f32.mrb[0].mxu0
  %v2520 = vadd.f32 %v2267, %v2519
  %v2521 = vpop.f32.mrb[0].mxu0
  %v2522 = vpop.f32.mrb[0].mxu0
  %v2523 = vadd.f32 %v2267, %v2522
  %v2524 = vpop.f32.mrb[0].mxu0
  %2525 = vmatprep.mubr.bf16.mxu0 0
  %2526 = vmatmul.mubr.bf16.gmra.mrb[0].mxu0 %v2236
  %v2527 = vpop.f32.mrb[0].mxu0
  %v2528 = vadd.f32 %v2267, %v2527
  %v2529 = vpop.f32.mrb[0].mxu0
  %v2530 = vpop.f32.mrb[0].mxu0
  %v2531 = vadd.f32 %v2267, %v2530
  %v2532 = vpop.f32.mrb[0].mxu0
  %2533 = vmatprep.mubr.bf16.mxu0 0
  %2534 = vmatmul.mubr.bf16.gmra.mrb[0].mxu0 %v2237
  %v2535 = vpop.f32.mrb[0].mxu0
  %v2536 = vadd.f32 %v2267, %v2535
  %v2537 = vpop.f32.mrb[0].mxu0
  %v2538 = vpop.f32.mrb[0].mxu0
  %v2539 = vadd.f32 %v2267, %v2538
  %v2540 = vpop.f32.mrb[0].mxu0
  %2541 = vmatprep.mubr.bf16.mxu0 0
  %2542 = vmatmul.mubr.bf16.gmra.mrb[0].mxu0 %v2238
  %v2543 = vpop.f32.mrb[0].mxu0
  %v2544 = vadd.f32 %v2267, %v2543
  %v2545 = vpop.f32.mrb[0].mxu0
  %v2546 = vpop.f32.mrb[0].mxu0
  %v2547 = vadd.f32 %v2267, %v2546
  %v2548 = vpop.f32.mrb[0].mxu0
  %2549 = vmatprep.mubr.bf16.mxu0 0
  %2550 = vmatmul.mubr.bf16.gmra.mrb[0].mxu0 %v2239
  %v2551 = vpop.f32.mrb[0].mxu0
  %v2552 = vadd.f32 %v2267, %v2551
  %v2553 = vpop.f32.mrb[0].mxu0
  %v2554 = vpop.f32.mrb[0].mxu0
  %v2555 = vadd.f32 %v2267, %v2554
  %v2556 = vpop.f32.mrb[0].mxu0
  %2557 = vmatprep.mubr.bf16.mxu0 0
  %2558 = vmatmul.mubr.bf16.gmra.mrb[0].mxu0 %v2240
  %v2559 = vpop.f32.mrb[0].mxu0
  %v2560 = vadd.f32 %v2267, %v2559
  %v2561 = vpop.f32.mrb[0].mxu0
  %v2562 = vpop.f32.mrb[0].mxu0
  %v2563 = vadd.f32 %v2267, %v2562
  %v2564 = vpop.f32.mrb[0].mxu0
  %2565 = vmatprep.mubr.bf16.mxu0 0
  %2566 = vmatmul.mubr.bf16.gmra.mrb[0].mxu0 %v2241
  %v2567 = vpop.f32.mrb[0].mxu0
  %v2568 = vadd.f32 %v2267, %v2567
  %v2569 = vpop.f32.mrb[0].mxu0
  %v2570 = vpop.f32.mrb[0].mxu0
  %v2571 = vadd.f32 %v2267, %v2570
  %v2572 = vpop.f32.mrb[0].mxu0
  %2573 = vmatprep.mubr.bf16.mxu0 0
  %2574 = vmatmul.mubr.bf16.gmra.mrb[0].mxu0 %v2242
  %v2575 = vpop.f32.mrb[0].mxu0
  %v2576 = vadd.f32 %v2267, %v2575
  %v2577 = vpop.f32.mrb[0].mxu0
  %v2578 = vpop.f32.mrb[0].mxu0
  %v2579 = vadd.f32 %v2267, %v2578
  %v2580 = vpop.f32.mrb[0].mxu0
  %2581 = vmatprep.mubr.bf16.mxu0 0
  %2582 = vmatmul.mubr.bf16.gmra.mrb[0].mxu0 %v2243
  %v2583 = vpop.f32.mrb[0].mxu0
  %v2584 = vadd.f32 %v2267, %v2583
  %v2585 = vpop.f32.mrb[0].mxu0
  %v2586 = vpop.f32.mrb[0].mxu0
  %v2587 = vadd.f32 %v2267, %v2586
  %v2588 = vpop.f32.mrb[0].mxu0
  %2589 = vmatprep.mubr.bf16.mxu0 0
  %2590 = vmatmul.mubr.bf16.gmra.mrb[0].mxu0 %v2244
  %v2591 = vpop.f32.mrb[0].mxu0
  %v2592 = vadd.f32 %v2267, %v2591
  %v2593 = vpop.f32.mrb[0].mxu0
  %v2594 = vpop.f32.mrb[0].mxu0
  %v2595 = vadd.f32 %v2267, %v2594
  %v2596 = vpop.f32.mrb[0].mxu0
  %2597 = vmatprep.mubr.bf16.mxu0 0
  %2598 = vmatmul.mubr.bf16.gmra.mrb[0].mxu0 %v2245
  %v2599 = vpop.f32.mrb[0].mxu0
  %v2600 = vadd.f32 %v2267, %v2599
  %v2601 = vpop.f32.mrb[0].mxu0
  %v2602 = vpop.f32.mrb[0].mxu0
  %v2603 = vadd.f32 %v2267, %v2602
  %v2604 = vpop.f32.mrb[0].mxu0
  %2605 = vdwg.mxu0
  %v2606 = vmul.f32 %v2150, %v2352
  %v2607 = vmul.f32 %v2151, %v2355
  %v2608 = vmul.f32 %v2152, %v2360
  %v2609 = vmul.f32 %v2153, %v2363
  %v2610 = vmul.f32 %v2154, %v2368
  %v2611 = vmul.f32 %v2155, %v2371
  %v2612 = vmul.f32 %v2156, %v2376
  %v2613 = vmul.f32 %v2157, %v2379
  %v2614 = vmul.f32 %v2158, %v2384
  %v2615 = vmul.f32 %v2159, %v2387
  %v2616 = vmul.f32 %v2160, %v2392
  %v2617 = vmul.f32 %v2161, %v2395
  %v2618 = vmul.f32 %v2162, %v2400
  %v2619 = vmul.f32 %v2163, %v2403
  %v2620 = vmul.f32 %v2164, %v2408
  %v2621 = vmul.f32 %v2165, %v2411
  %v2622 = vmul.f32 %v2166, %v2416
  %v2623 = vmul.f32 %v2167, %v2419
  %v2624 = vmul.f32 %v2168, %v2424
  %v2625 = vmul.f32 %v2169, %v2427
  %v2626 = vmul.f32 %v2170, %v2432
  %v2627 = vmul.f32 %v2171, %v2435
  %v2628 = vmul.f32 %v2172, %v2440
  %v2629 = vmul.f32 %v2173, %v2443
  %v2630 = vmul.f32 %v2174, %v2448
  %v2631 = vmul.f32 %v2175, %v2451
  %v2632 = vmul.f32 %v2176, %v2456
  %v2633 = vmul.f32 %v2177, %v2459
  %v2634 = vmul.f32 %v2178, %v2464
  %v2635 = vmul.f32 %v2179, %v2467
  %v2636 = vmul.f32 %v2180, %v2472
  %v2637 = vmul.f32 %v2181, %v2475
  %v2638 = vmul.f32 %v2182, %v2480
  %v2639 = vmul.f32 %v2183, %v2483
  %v2640 = vmul.f32 %v2184, %v2488
  %v2641 = vmul.f32 %v2185, %v2491
  %v2642 = vmul.f32 %v2186, %v2496
  %v2643 = vmul.f32 %v2187, %v2499
  %v2644 = vmul.f32 %v2188, %v2504
  %v2645 = vmul.f32 %v2189, %v2507
  %v2646 = vmul.f32 %v2190, %v2512
  %v2647 = vmul.f32 %v2191, %v2515
  %v2648 = vmul.f32 %v2192, %v2520
  %v2649 = vmul.f32 %v2193, %v2523
  %v2650 = vmul.f32 %v2194, %v2528
  %v2651 = vmul.f32 %v2195, %v2531
  %v2652 = vmul.f32 %v2196, %v2536
  %v2653 = vmul.f32 %v2197, %v2539
  %v2654 = vmul.f32 %v2198, %v2544
  %v2655 = vmul.f32 %v2199, %v2547
  %v2656 = vmul.f32 %v2200, %v2552
  %v2657 = vmul.f32 %v2201, %v2555
  %v2658 = vmul.f32 %v2202, %v2560
  %v2659 = vmul.f32 %v2203, %v2563
  %v2660 = vmul.f32 %v2204, %v2568
  %v2661 = vmul.f32 %v2205, %v2571
  %v2662 = vmul.f32 %v2206, %v2576
  %v2663 = vmul.f32 %v2207, %v2579
  %v2664 = vmul.f32 %v2208, %v2584
  %v2665 = vmul.f32 %v2209, %v2587
  %v2666 = vmul.f32 %v2210, %v2592
  %v2667 = vmul.f32 %v2211, %v2595
  %v2668 = vmul.f32 %v2212, %v2600
  %v2669 = vmul.f32 %v2213, %v2603
  %2670 = vadd.xlane.f32.xlu0 %v2606
  %v2671 = vpop.xlane.xlu0 %2670
  %2672 = vadd.xlane.f32.xlu0 %v2607
  %v2673 = vpop.xlane.xlu0 %2672
  %2674 = vadd.xlane.f32.xlu0 %v2608
  %v2675 = vpop.xlane.xlu0 %2674
  %2676 = vadd.xlane.f32.xlu0 %v2609
  %v2677 = vpop.xlane.xlu0 %2676
  %2678 = vadd.xlane.f32.xlu0 %v2610
  %v2679 = vpop.xlane.xlu0 %2678
  %2680 = vadd.xlane.f32.xlu0 %v2611
  %v2681 = vpop.xlane.xlu0 %2680
  %2682 = vadd.xlane.f32.xlu0 %v2612
  %v2683 = vpop.xlane.xlu0 %2682
  %2684 = vadd.xlane.f32.xlu0 %v2613
  %v2685 = vpop.xlane.xlu0 %2684
  %2686 = vadd.xlane.f32.xlu0 %v2614
  %v2687 = vpop.xlane.xlu0 %2686
  %2688 = vadd.xlane.f32.xlu0 %v2615
  %v2689 = vpop.xlane.xlu0 %2688
  %2690 = vadd.xlane.f32.xlu0 %v2616
  %v2691 = vpop.xlane.xlu0 %2690
  %2692 = vadd.xlane.f32.xlu0 %v2617
  %v2693 = vpop.xlane.xlu0 %2692
  %2694 = vadd.xlane.f32.xlu0 %v2618
  %v2695 = vpop.xlane.xlu0 %2694
  %2696 = vadd.xlane.f32.xlu0 %v2619
  %v2697 = vpop.xlane.xlu0 %2696
  %2698 = vadd.xlane.f32.xlu0 %v2620
  %v2699 = vpop.xlane.xlu0 %2698
  %2700 = vadd.xlane.f32.xlu0 %v2621
  %v2701 = vpop.xlane.xlu0 %2700
  %2702 = vadd.xlane.f32.xlu0 %v2622
  %v2703 = vpop.xlane.xlu0 %2702
  %2704 = vadd.xlane.f32.xlu0 %v2623
  %v2705 = vpop.xlane.xlu0 %2704
  %2706 = vadd.xlane.f32.xlu0 %v2624
  %v2707 = vpop.xlane.xlu0 %2706
  %2708 = vadd.xlane.f32.xlu0 %v2625
  %v2709 = vpop.xlane.xlu0 %2708
  %2710 = vadd.xlane.f32.xlu0 %v2626
  %v2711 = vpop.xlane.xlu0 %2710
  %2712 = vadd.xlane.f32.xlu0 %v2627
  %v2713 = vpop.xlane.xlu0 %2712
  %2714 = vadd.xlane.f32.xlu0 %v2628
  %v2715 = vpop.xlane.xlu0 %2714
  %2716 = vadd.xlane.f32.xlu0 %v2629
  %v2717 = vpop.xlane.xlu0 %2716
  %2718 = vadd.xlane.f32.xlu0 %v2630
  %v2719 = vpop.xlane.xlu0 %2718
  %2720 = vadd.xlane.f32.xlu0 %v2631
  %v2721 = vpop.xlane.xlu0 %2720
  %2722 = vadd.xlane.f32.xlu0 %v2632
  %v2723 = vpop.xlane.xlu0 %2722
  %2724 = vadd.xlane.f32.xlu0 %v2633
  %v2725 = vpop.xlane.xlu0 %2724
  %2726 = vadd.xlane.f32.xlu0 %v2634
  %v2727 = vpop.xlane.xlu0 %2726
  %2728 = vadd.xlane.f32.xlu0 %v2635
  %v2729 = vpop.xlane.xlu0 %2728
  %2730 = vadd.xlane.f32.xlu0 %v2636
  %v2731 = vpop.xlane.xlu0 %2730
  %2732 = vadd.xlane.f32.xlu0 %v2637
  %v2733 = vpop.xlane.xlu0 %2732
  %2734 = vadd.xlane.f32.xlu0 %v2638
  %v2735 = vpop.xlane.xlu0 %2734
  %2736 = vadd.xlane.f32.xlu0 %v2639
  %v2737 = vpop.xlane.xlu0 %2736
  %2738 = vadd.xlane.f32.xlu0 %v2640
  %v2739 = vpop.xlane.xlu0 %2738
  %2740 = vadd.xlane.f32.xlu0 %v2641
  %v2741 = vpop.xlane.xlu0 %2740
  %2742 = vadd.xlane.f32.xlu0 %v2642
  %v2743 = vpop.xlane.xlu0 %2742
  %2744 = vadd.xlane.f32.xlu0 %v2643
  %v2745 = vpop.xlane.xlu0 %2744
  %2746 = vadd.xlane.f32.xlu0 %v2644
  %v2747 = vpop.xlane.xlu0 %2746
  %2748 = vadd.xlane.f32.xlu0 %v2645
  %v2749 = vpop.xlane.xlu0 %2748
  %2750 = vadd.xlane.f32.xlu0 %v2646
  %v2751 = vpop.xlane.xlu0 %2750
  %2752 = vadd.xlane.f32.xlu0 %v2647
  %v2753 = vpop.xlane.xlu0 %2752
  %2754 = vadd.xlane.f32.xlu0 %v2648
  %v2755 = vpop.xlane.xlu0 %2754
  %2756 = vadd.xlane.f32.xlu0 %v2649
  %v2757 = vpop.xlane.xlu0 %2756
  %2758 = vadd.xlane.f32.xlu0 %v2650
  %v2759 = vpop.xlane.xlu0 %2758
  %2760 = vadd.xlane.f32.xlu0 %v2651
  %v2761 = vpop.xlane.xlu0 %2760
  %2762 = vadd.xlane.f32.xlu0 %v2652
  %v2763 = vpop.xlane.xlu0 %2762
  %2764 = vadd.xlane.f32.xlu0 %v2653
  %v2765 = vpop.xlane.xlu0 %2764
  %2766 = vadd.xlane.f32.xlu0 %v2654
  %v2767 = vpop.xlane.xlu0 %2766
  %2768 = vadd.xlane.f32.xlu0 %v2655
  %v2769 = vpop.xlane.xlu0 %2768
  %2770 = vadd.xlane.f32.xlu0 %v2656
  %v2771 = vpop.xlane.xlu0 %2770
  %2772 = vadd.xlane.f32.xlu0 %v2657
  %v2773 = vpop.xlane.xlu0 %2772
  %2774 = vadd.xlane.f32.xlu0 %v2658
  %v2775 = vpop.xlane.xlu0 %2774
  %2776 = vadd.xlane.f32.xlu0 %v2659
  %v2777 = vpop.xlane.xlu0 %2776
  %2778 = vadd.xlane.f32.xlu0 %v2660
  %v2779 = vpop.xlane.xlu0 %2778
  %2780 = vadd.xlane.f32.xlu0 %v2661
  %v2781 = vpop.xlane.xlu0 %2780
  %2782 = vadd.xlane.f32.xlu0 %v2662
  %v2783 = vpop.xlane.xlu0 %2782
  %2784 = vadd.xlane.f32.xlu0 %v2663
  %v2785 = vpop.xlane.xlu0 %2784
  %2786 = vadd.xlane.f32.xlu0 %v2664
  %v2787 = vpop.xlane.xlu0 %2786
  %2788 = vadd.xlane.f32.xlu0 %v2665
  %v2789 = vpop.xlane.xlu0 %2788
  %2790 = vadd.xlane.f32.xlu0 %v2666
  %v2791 = vpop.xlane.xlu0 %2790
  %2792 = vadd.xlane.f32.xlu0 %v2667
  %v2793 = vpop.xlane.xlu0 %2792
  %2794 = vadd.xlane.f32.xlu0 %v2668
  %v2795 = vpop.xlane.xlu0 %2794
  %2796 = vadd.xlane.f32.xlu0 %v2669
  %v2797 = vpop.xlane.xlu0 %2796
  %v2798 = vadd.f32 %v2671, 0.0
  %v2799 = vadd.f32 %v2673, 0.0
  %v2800 = vadd.f32 %v2675, 0.0
  %v2801 = vadd.f32 %v2677, 0.0
  %v2802 = vadd.f32 %v2679, 0.0
  %v2803 = vadd.f32 %v2681, 0.0
  %v2804 = vadd.f32 %v2683, 0.0
  %v2805 = vadd.f32 %v2685, 0.0
  %v2806 = vadd.f32 %v2687, 0.0
  %v2807 = vadd.f32 %v2689, 0.0
  %v2808 = vadd.f32 %v2691, 0.0
  %v2809 = vadd.f32 %v2693, 0.0
  %v2810 = vadd.f32 %v2695, 0.0
  %v2811 = vadd.f32 %v2697, 0.0
  %v2812 = vadd.f32 %v2699, 0.0
  %v2813 = vadd.f32 %v2701, 0.0
  %v2814 = vadd.f32 %v2703, 0.0
  %v2815 = vadd.f32 %v2705, 0.0
  %v2816 = vadd.f32 %v2707, 0.0
  %v2817 = vadd.f32 %v2709, 0.0
  %v2818 = vadd.f32 %v2711, 0.0
  %v2819 = vadd.f32 %v2713, 0.0
  %v2820 = vadd.f32 %v2715, 0.0
  %v2821 = vadd.f32 %v2717, 0.0
  %v2822 = vadd.f32 %v2719, 0.0
  %v2823 = vadd.f32 %v2721, 0.0
  %v2824 = vadd.f32 %v2723, 0.0
  %v2825 = vadd.f32 %v2725, 0.0
  %v2826 = vadd.f32 %v2727, 0.0
  %v2827 = vadd.f32 %v2729, 0.0
  %v2828 = vadd.f32 %v2731, 0.0
  %v2829 = vadd.f32 %v2733, 0.0
  %v2830 = vadd.f32 %v2735, 0.0
  %v2831 = vadd.f32 %v2737, 0.0
  %v2832 = vadd.f32 %v2739, 0.0
  %v2833 = vadd.f32 %v2741, 0.0
  %v2834 = vadd.f32 %v2743, 0.0
  %v2835 = vadd.f32 %v2745, 0.0
  %v2836 = vadd.f32 %v2747, 0.0
  %v2837 = vadd.f32 %v2749, 0.0
  %v2838 = vadd.f32 %v2751, 0.0
  %v2839 = vadd.f32 %v2753, 0.0
  %v2840 = vadd.f32 %v2755, 0.0
  %v2841 = vadd.f32 %v2757, 0.0
  %v2842 = vadd.f32 %v2759, 0.0
  %v2843 = vadd.f32 %v2761, 0.0
  %v2844 = vadd.f32 %v2763, 0.0
  %v2845 = vadd.f32 %v2765, 0.0
  %v2846 = vadd.f32 %v2767, 0.0
  %v2847 = vadd.f32 %v2769, 0.0
  %v2848 = vadd.f32 %v2771, 0.0
  %v2849 = vadd.f32 %v2773, 0.0
  %v2850 = vadd.f32 %v2775, 0.0
  %v2851 = vadd.f32 %v2777, 0.0
  %v2852 = vadd.f32 %v2779, 0.0
  %v2853 = vadd.f32 %v2781, 0.0
  %v2854 = vadd.f32 %v2783, 0.0
  %v2855 = vadd.f32 %v2785, 0.0
  %v2856 = vadd.f32 %v2787, 0.0
  %v2857 = vadd.f32 %v2789, 0.0
  %v2858 = vadd.f32 %v2791, 0.0
  %v2859 = vadd.f32 %v2793, 0.0
  %v2860 = vadd.f32 %v2795, 0.0
  %v2861 = vadd.f32 %v2797, 0.0
  %vm2862 = vcmask 7168
  %2863 = vst.msk [vmem:[%s7] sm:$0xff] %vm2862, %v2798
  %2864 = vst.msk [vmem:[%s7 + $0x8] sm:$0xff] %vm2862, %v2799
  %2865 = vst.msk [vmem:[%s7 + $0x10] sm:$0xff] %vm2862, %v2800
  %2866 = vst.msk [vmem:[%s7 + $0x18] sm:$0xff] %vm2862, %v2801
  %2867 = vst.msk [vmem:[%s7 + $0x20] sm:$0xff] %vm2862, %v2802
  %2868 = vst.msk [vmem:[%s7 + $0x28] sm:$0xff] %vm2862, %v2803
  %2869 = vst.msk [vmem:[%s7 + $0x30] sm:$0xff] %vm2862, %v2804
  %2870 = vst.msk [vmem:[%s7 + $0x38] sm:$0xff] %vm2862, %v2805
  %2871 = vst.msk [vmem:[%s7 + $0x40] sm:$0xff] %vm2862, %v2806
  %2872 = vst.msk [vmem:[%s7 + $0x48] sm:$0xff] %vm2862, %v2807
  %2873 = vst.msk [vmem:[%s7 + $0x50] sm:$0xff] %vm2862, %v2808
  %2874 = vst.msk [vmem:[%s7 + $0x58] sm:$0xff] %vm2862, %v2809
  %2875 = vst.msk [vmem:[%s7 + $0x60] sm:$0xff] %vm2862, %v2810
  %2876 = vst.msk [vmem:[%s7 + $0x68] sm:$0xff] %vm2862, %v2811
  %2877 = vst.msk [vmem:[%s7 + $0x70] sm:$0xff] %vm2862, %v2812
  %2878 = vst.msk [vmem:[%s7 + $0x78] sm:$0xff] %vm2862, %v2813
  %2879 = vst.msk [vmem:[%s7 + $0x80] sm:$0xff] %vm2862, %v2814
  %2880 = vst.msk [vmem:[%s7 + $0x88] sm:$0xff] %vm2862, %v2815
  %2881 = vst.msk [vmem:[%s7 + $0x90] sm:$0xff] %vm2862, %v2816
  %2882 = vst.msk [vmem:[%s7 + $0x98] sm:$0xff] %vm2862, %v2817
  %2883 = vst.msk [vmem:[%s7 + $0xa0] sm:$0xff] %vm2862, %v2818
  %2884 = vst.msk [vmem:[%s7 + $0xa8] sm:$0xff] %vm2862, %v2819
  %2885 = vst.msk [vmem:[%s7 + $0xb0] sm:$0xff] %vm2862, %v2820
  %2886 = vst.msk [vmem:[%s7 + $0xb8] sm:$0xff] %vm2862, %v2821
  %2887 = vst.msk [vmem:[%s7 + $0xc0] sm:$0xff] %vm2862, %v2822
  %2888 = vst.msk [vmem:[%s7 + $0xc8] sm:$0xff] %vm2862, %v2823
  %2889 = vst.msk [vmem:[%s7 + $0xd0] sm:$0xff] %vm2862, %v2824
  %2890 = vst.msk [vmem:[%s7 + $0xd8] sm:$0xff] %vm2862, %v2825
  %2891 = vst.msk [vmem:[%s7 + $0xe0] sm:$0xff] %vm2862, %v2826
  %2892 = vst.msk [vmem:[%s7 + $0xe8] sm:$0xff] %vm2862, %v2827
  %2893 = vst.msk [vmem:[%s7 + $0xf0] sm:$0xff] %vm2862, %v2828
  %2894 = vst.msk [vmem:[%s7 + $0xf8] sm:$0xff] %vm2862, %v2829
  %2895 = vst.msk [vmem:[%s7 + $0x100] sm:$0xff] %vm2862, %v2830
  %2896 = vst.msk [vmem:[%s7 + $0x108] sm:$0xff] %vm2862, %v2831
  %2897 = vst.msk [vmem:[%s7 + $0x110] sm:$0xff] %vm2862, %v2832
  %2898 = vst.msk [vmem:[%s7 + $0x118] sm:$0xff] %vm2862, %v2833
  %2899 = vst.msk [vmem:[%s7 + $0x120] sm:$0xff] %vm2862, %v2834
  %2900 = vst.msk [vmem:[%s7 + $0x128] sm:$0xff] %vm2862, %v2835
  %2901 = vst.msk [vmem:[%s7 + $0x130] sm:$0xff] %vm2862, %v2836
  %2902 = vst.msk [vmem:[%s7 + $0x138] sm:$0xff] %vm2862, %v2837
  %2903 = vst.msk [vmem:[%s7 + $0x140] sm:$0xff] %vm2862, %v2838
  %2904 = vst.msk [vmem:[%s7 + $0x148] sm:$0xff] %vm2862, %v2839
  %2905 = vst.msk [vmem:[%s7 + $0x150] sm:$0xff] %vm2862, %v2840
  %2906 = vst.msk [vmem:[%s7 + $0x158] sm:$0xff] %vm2862, %v2841
  %2907 = vst.msk [vmem:[%s7 + $0x160] sm:$0xff] %vm2862, %v2842
  %2908 = vst.msk [vmem:[%s7 + $0x168] sm:$0xff] %vm2862, %v2843
  %2909 = vst.msk [vmem:[%s7 + $0x170] sm:$0xff] %vm2862, %v2844
  %2910 = vst.msk [vmem:[%s7 + $0x178] sm:$0xff] %vm2862, %v2845
  %2911 = vst.msk [vmem:[%s7 + $0x180] sm:$0xff] %vm2862, %v2846
  %2912 = vst.msk [vmem:[%s7 + $0x188] sm:$0xff] %vm2862, %v2847
  %2913 = vst.msk [vmem:[%s7 + $0x190] sm:$0xff] %vm2862, %v2848
  %2914 = vst.msk [vmem:[%s7 + $0x198] sm:$0xff] %vm2862, %v2849
  %2915 = vst.msk [vmem:[%s7 + $0x1a0] sm:$0xff] %vm2862, %v2850
  %2916 = vst.msk [vmem:[%s7 + $0x1a8] sm:$0xff] %vm2862, %v2851
  %2917 = vst.msk [vmem:[%s7 + $0x1b0] sm:$0xff] %vm2862, %v2852
  %2918 = vst.msk [vmem:[%s7 + $0x1b8] sm:$0xff] %vm2862, %v2853
  %2919 = vst.msk [vmem:[%s7 + $0x1c0] sm:$0xff] %vm2862, %v2854
  %2920 = vst.msk [vmem:[%s7 + $0x1c8] sm:$0xff] %vm2862, %v2855
  %2921 = vst.msk [vmem:[%s7 + $0x1d0] sm:$0xff] %vm2862, %v2856
  %2922 = vst.msk [vmem:[%s7 + $0x1d8] sm:$0xff] %vm2862, %v2857
  %2923 = vst.msk [vmem:[%s7 + $0x1e0] sm:$0xff] %vm2862, %v2858
  %2924 = vst.msk [vmem:[%s7 + $0x1e8] sm:$0xff] %vm2862, %v2859
  %2925 = vst.msk [vmem:[%s7 + $0x1f0] sm:$0xff] %vm2862, %v2860
  %2926 = vst.msk [vmem:[%s7 + $0x1f8] sm:$0xff] %vm2862, %v2861
  // Predicated region
  $region30: #{tpu_custom_call.1} parent=0 // pred_check
    _
  $region31: #{tpu_custom_call.1} parent=0 // pred_check_branch
    %2928 = sbr.rel (0) target = $region33
  $region32: #{tpu_custom_call.1} parent=0 // pred_region
    _
  $region33: #{tpu_custom_call.1} parent=0 // pred_fallthru
    _
  // Predicated region
  $region34: #{tpu_custom_call.1} parent=0 // pred_check
    _
  $region35: #{tpu_custom_call.1} parent=0 // pred_check_branch
    %2930 = sbr.rel (0) target = $region37
  $region36: #{tpu_custom_call.1} parent=0 // pred_region
    _
  $region37: #{tpu_custom_call.1} parent=0 // pred_fallthru
    _

</llo_original>
